<compile_context>
chip_gen: v6e
topology: v6e:2x2x1
jax: 0.10.0
libtpu: 0.0.40
codegen_flags: <defaults>
</compile_context>

<pallas_src>
import functools

import jax
import jax.numpy as jnp
from jax.experimental import pallas as pl
from jax.experimental.pallas import tpu as pltpu


def _round_up(n, m):
    return ((n + m - 1) // m) * m


def _silu(x, dtype=jnp.float32):
    x = x.astype(dtype)
    return x * jax.nn.sigmoid(x)


def _silu_compute_dtype():
    """bf16 SiLU on v6e/v7x (bf16 EUP ~2x rate); f32 on <= v5 (no bf16 EUP/VPU path)."""
    try:
        kind = jax.devices()[0].device_kind.lower()
    except Exception:
        return jnp.float32
    if any(tag in kind for tag in ("v2", "v3", "v4", "v5")):
        return jnp.float32
    return jnp.bfloat16


def mlp_resnet_block_kernel(
    x_ref,    # (TM, Din)    activations (f32, or bf16 if stream_x_bf16)
    emb_ref,  # (TM, De)     raw temporal embedding, f32
    w1_ref,   # (Din, H)     bf16  in_layers Linear1
    s1_ref,   # (1, H)       f32   BN1 scale  = gamma / sqrt(var + eps)
    b1_ref,   # (1, H)       f32   folded shift = lin_bias*scale + (beta - mean*scale)
    w2_ref,   # (H, Dout)    bf16  in_layers Linear2
    s2_ref,   # (1, Dout)    f32
    b2_ref,   # (1, Dout)    f32
    we_ref,   # (De, Dout)   bf16  emb_layers Linear
    be_ref,   # (1, Dout)    f32
    wo_ref,   # (Dout, Dout) bf16  out_layers Linear
    bo_ref,   # (1, Dout)    f32
    out_ref,  # (TM, Dout)   f32
    *,
    silu_dtype,
):
    x = x_ref[...]
    x_f32 = x.astype(jnp.float32)      # identity skip path stays f32
    x_bf16 = x.astype(jnp.bfloat16)    # MXU operand

    # ---- emb_layers: SiLU -> Linear(De -> Dout), fused (K=16 GEMM rides on MXU slack) ----
    e = _silu(emb_ref[...], jnp.float32)
    e = jnp.dot(e.astype(jnp.bfloat16), we_ref[...],
                preferred_element_type=jnp.float32) + be_ref[...]

    # ---- in_layers: Linear -> BN(eval) -> SiLU -> Dropout(id) -> Linear -> BN -> SiLU ----
    h = jnp.dot(x_bf16, w1_ref[...], preferred_element_type=jnp.float32)
    h = h * s1_ref[...] + b1_ref[...]          # BN scale/shift in f32 on the accumulator
    h = _silu(h, silu_dtype)
    h = jnp.dot(h.astype(jnp.bfloat16), w2_ref[...], preferred_element_type=jnp.float32)
    h = h * s2_ref[...] + b2_ref[...]
    h = _silu(h, silu_dtype)

    # ---- h = h + emb_out ; out_layers: SiLU -> Dropout(id) -> Linear ----
    h = h.astype(jnp.float32) + e
    h = _silu(h, silu_dtype)
    h = jnp.dot(h.astype(jnp.bfloat16), wo_ref[...],
                preferred_element_type=jnp.float32) + bo_ref[...]

    # ---- skip connection: Identity (input_dim == output_dim) ----
    out_ref[...] = (x_f32 + h).astype(out_ref.dtype)


def prep_params(params, weight_dtype=jnp.bfloat16):
    """Eval-mode prep: only the MXU weight operands are cast to bf16; BatchNorm
    scale/shift stay f32 per-feature vectors applied to the f32 accumulator
    (avoids precision loss from folding large/tiny BN scales into bf16 weights)."""
    f32 = jnp.float32
    w1 = params["w1"].astype(weight_dtype)
    s1 = params["s1"].astype(f32)
    b1 = (params["b1"] * params["s1"] + params["t1"]).astype(f32)
    w2 = params["w2"].astype(weight_dtype)
    s2 = params["s2"].astype(f32)
    b2 = (params["b2"] * params["s2"] + params["t2"]).astype(f32)
    we = params["we"].astype(weight_dtype)
    be = params["be"].astype(f32)
    wo = params["wo"].astype(weight_dtype)
    bo = params["bo"].astype(f32)
    return (w1, s1, b1, w2, s2, b2, we, be, wo, bo)


def _choose_tiling(B, target_tm):
    """Pick (tm, B_pad).

    Prefers a tile that divides round_up(B, 8) exactly (no pad / no output slice),
    capped at target_tm and at B/2 so the grid has >= 2 steps (v7x: both TensorCores
    get work). Falls back to padding only when divisor-based tiles would be
    degenerately small for a large batch."""
    B8 = _round_up(B, 8)
    cap = min(target_tm, B8)
    if B8 >= 16:
        cap = min(cap, B8 // 2)
    cap = max(8, (cap // 8) * 8)
    tm = 8
    for cand in range(8, cap + 1, 8):
        if B8 % cand == 0:
            tm = cand
    if tm < 256 and B8 >= 4096:
        best = None
        for cand in (2048, 1024, 512, 256):   # prefer larger tile on ties
            if cand > cap:
                continue
            padded = _round_up(B8, cand)
            if best is None or padded < best[1]:
                best = (cand, padded)
        if best is not None:
            return best
    return tm, B8


def mlp_resnet_block(x, emb, params, *, tm=2048, stream_x_bf16=False):
    B, Din = x.shape
    De = emb.shape[1]
    H = params["w1"].shape[1]
    Dout = params["wo"].shape[1]
    assert Din == Dout, "only the Identity skip path (input_dim == output_dim) is implemented"
    assert De == params["we"].shape[0]

    weights = prep_params(params)
    silu_dtype = _silu_compute_dtype()

    tm, B_pad = _choose_tiling(B, tm)
    if stream_x_bf16:
        # Optional precision tradeoff: halves x read traffic; the residual is then
        # computed from a bf16-rounded x.
        x = x.astype(jnp.bfloat16)
    if B_pad != B:
        # Padded rows produce bias-driven garbage that is sliced off below — never read out[B:].
        x_p = jnp.pad(x, ((0, B_pad - B), (0, 0)))
        emb_p = jnp.pad(emb, ((0, B_pad - B), (0, 0)))
    else:
        x_p, emb_p = x, emb
    grid = (B_pad // tm,)

    act = lambda d: pl.BlockSpec((tm, d), lambda i: (i, 0))           # batch-tiled, pipelined
    res = lambda a: pl.BlockSpec(a.shape, lambda i: (0,) * a.ndim)    # VMEM-resident params

    weight_bytes = sum(int(w.size) * w.dtype.itemsize for w in weights)
    flops = 2 * B_pad * (Din * H + H * Dout + De * Dout + Dout * Dout)
    transcendentals = B_pad * (De + H + 2 * Dout)                     # 4 sigmoids
    bytes_accessed = (
        int(x_p.size) * x_p.dtype.itemsize
        + int(emb_p.size) * emb_p.dtype.itemsize
        + B_pad * Dout * 4
        + weight_bytes
    )

    # Double-buffered activation tiles + resident weights + headroom for f32 temporaries.
    io_tile_bytes = tm * (Din * x_p.dtype.itemsize + De * 4 + Dout * 4)
    vmem_need = weight_bytes + 2 * io_tile_bytes + 8 * tm * max(H, Dout) * 4
    vmem_limit = int(min(max(2 * vmem_need, 32 * 1024 * 1024), 56 * 1024 * 1024))

    out = pl.pallas_call(
        functools.partial(mlp_resnet_block_kernel, silu_dtype=silu_dtype),
        out_shape=jax.ShapeDtypeStruct((B_pad, Dout), jnp.float32),
        grid=grid,
        in_specs=[act(Din), act(De)] + [res(w) for w in weights],
        out_specs=act(Dout),
        compiler_params=pltpu.CompilerParams(
            dimension_semantics=("parallel",),
            vmem_limit_bytes=vmem_limit),
        cost_estimate=pl.CostEstimate(
            flops=flops,
            transcendentals=transcendentals,
            bytes_accessed=bytes_accessed),
    )(x_p, emb_p, *weights)

    return out if B_pad == B else out[:B]


def init_params(key, input_dim, hidden_dim, output_dim, embedding_dim, eps=1e-5):
    """Deterministic parameter init (shapes per the PyTorch module __init__), all f32."""
    ks = jax.random.split(key, 16)

    def linear(kw, kb, fan_in, fan_out):
        # PyTorch Linear weight is (out,in); build then transpose to (in,out).
        w = jax.random.normal(kw, (fan_out, fan_in), jnp.float32) / jnp.sqrt(fan_out)
        bound = 1.0 / jnp.sqrt(fan_in)
        b = jax.random.uniform(kb, (1, fan_out), jnp.float32, -bound, bound)
        return w.T, b

    def bn_fold(kg, kb, km, kv, dim):
        gamma = 1.0 + 0.1 * jax.random.normal(kg, (1, dim), jnp.float32)
        beta = 0.1 * jax.random.normal(kb, (1, dim), jnp.float32)
        rmean = 0.1 * jax.random.normal(km, (1, dim), jnp.float32)
        rvar = jnp.abs(1.0 + 0.1 * jax.random.normal(kv, (1, dim), jnp.float32))
        scale = gamma / jnp.sqrt(rvar + eps)
        shift = beta - rmean * scale
        return scale, shift

    w1, b1 = linear(ks[0], ks[1], input_dim, hidden_dim)
    s1, t1 = bn_fold(ks[2], ks[3], ks[4], ks[5], hidden_dim)
    w2, b2 = linear(ks[6], ks[7], hidden_dim, output_dim)
    s2, t2 = bn_fold(ks[8], ks[9], ks[10], ks[11], output_dim)
    we, be = linear(ks[12], ks[13], embedding_dim, output_dim)
    wo, bo = linear(ks[14], ks[15], output_dim, output_dim)

    return dict(w1=w1, b1=b1, s1=s1, t1=t1,
                w2=w2, b2=b2, s2=s2, t2=t2,
                we=we, be=be, wo=wo, bo=bo)


def reference(x, emb, p):
    """Pure-JAX f32 reference (module eval-mode semantics)."""
    h = x @ p["w1"] + p["b1"]
    h = h * p["s1"] + p["t1"]
    h = _silu(h)
    h = h @ p["w2"] + p["b2"]
    h = h * p["s2"] + p["t2"]
    h = _silu(h)
    e = _silu(emb) @ p["we"] + p["be"]
    h = _silu(h + e) @ p["wo"] + p["bo"]
    return x + h


if __name__ == "__main__":
    Din, H, Dout, De = 128, 128, 128, 16  # input_dim == output_dim -> Identity skip
    key = jax.random.PRNGKey(0)
    kx, ke, kp = jax.random.split(key, 3)
    params = init_params(kp, Din, H, Dout, De)

    # case 1: B=384 -> tm=192, grid=(2,), no padding, exercises pipelining + 2-step parallel grid
    # case 2: B=37  -> ragged batch, pads only to the next multiple of 8
    # case 3: B=8   -> single minimal tile
    for B in (384, 37, 8):
        x = jax.random.normal(jax.random.fold_in(kx, B), (B, Din), jnp.float32)
        emb = jax.random.normal(jax.random.fold_in(ke, B), (B, De), jnp.float32)

        out = jax.block_until_ready(mlp_resnet_block(x, emb, params))
        ref = reference(x, emb, params)

        assert out.shape == (B, Dout)
        # bf16 MXU operands (and bf16 SiLU on v6e/v7x) with f32 accumulation -> loose tolerance
        err = float(jnp.max(jnp.abs(out - ref)))
        assert jnp.allclose(out, ref, atol=1e-1, rtol=5e-2), err

    print("KERNEL_OK")
</pallas_src>

<mosaic_0001>
module attributes {stable_mosaic.version = 11 : i64} {
  func.func @mlp_resnet_block_kernel(%arg0: i32, %arg1: memref<192x128xf32, #tpu.memory_space<vmem>>, %arg2: memref<192x16xf32, #tpu.memory_space<vmem>>, %arg3: memref<128x128xbf16, #tpu.memory_space<vmem>>, %arg4: memref<1x128xf32, #tpu.memory_space<vmem>>, %arg5: memref<1x128xf32, #tpu.memory_space<vmem>>, %arg6: memref<128x128xbf16, #tpu.memory_space<vmem>>, %arg7: memref<1x128xf32, #tpu.memory_space<vmem>>, %arg8: memref<1x128xf32, #tpu.memory_space<vmem>>, %arg9: memref<16x128xbf16, #tpu.memory_space<vmem>>, %arg10: memref<1x128xf32, #tpu.memory_space<vmem>>, %arg11: memref<128x128xbf16, #tpu.memory_space<vmem>>, %arg12: memref<1x128xf32, #tpu.memory_space<vmem>>, %arg13: memref<192x128xf32, #tpu.memory_space<vmem>>) attributes {dimension_semantics = [#tpu.dimension_semantics<parallel>], iteration_bounds = array<i64: 2>, scalar_prefetch = 0 : i64, scratch_operands = 0 : i64, tpu.core_type = #tpu.core_type<tc>, window_params = [{transform_indices = @transform_0, window_bounds = array<i64: 192, 128>}, {transform_indices = @transform_1, window_bounds = array<i64: 192, 16>}, {pipeline_mode = #tpu.pipeline_mode<synchronous>, transform_indices = @transform_2, window_bounds = array<i64: 128, 128>}, {pipeline_mode = #tpu.pipeline_mode<synchronous>, transform_indices = @transform_3, window_bounds = array<i64: 1, 128>}, {pipeline_mode = #tpu.pipeline_mode<synchronous>, transform_indices = @transform_4, window_bounds = array<i64: 1, 128>}, {pipeline_mode = #tpu.pipeline_mode<synchronous>, transform_indices = @transform_5, window_bounds = array<i64: 128, 128>}, {pipeline_mode = #tpu.pipeline_mode<synchronous>, transform_indices = @transform_6, window_bounds = array<i64: 1, 128>}, {pipeline_mode = #tpu.pipeline_mode<synchronous>, transform_indices = @transform_7, window_bounds = array<i64: 1, 128>}, {pipeline_mode = #tpu.pipeline_mode<synchronous>, transform_indices = @transform_8, window_bounds = array<i64: 16, 128>}, {pipeline_mode = #tpu.pipeline_mode<synchronous>, transform_indices = @transform_9, window_bounds = array<i64: 1, 128>}, {pipeline_mode = #tpu.pipeline_mode<synchronous>, transform_indices = @transform_10, window_bounds = array<i64: 128, 128>}, {pipeline_mode = #tpu.pipeline_mode<synchronous>, transform_indices = @transform_11, window_bounds = array<i64: 1, 128>}, {transform_indices = @transform_12, window_bounds = array<i64: 192, 128>}]} {
    %c0 = arith.constant 0 : index
    %c0_0 = arith.constant 0 : index
    %0 = vector.load %arg1[%c0, %c0_0] : memref<192x128xf32, #tpu.memory_space<vmem>>, vector<192x128xf32>
    %1 = arith.truncf %0 : vector<192x128xf32> to vector<192x128xbf16>
    %c0_1 = arith.constant 0 : index
    %c0_2 = arith.constant 0 : index
    %2 = vector.load %arg2[%c0_1, %c0_2] : memref<192x16xf32, #tpu.memory_space<vmem>>, vector<192x16xf32>
    %3 = arith.negf %2 : vector<192x16xf32>
    %4 = math.exp %3 : vector<192x16xf32>
    %cst = arith.constant 1.000000e+00 : f32
    %5 = vector.broadcast %cst : f32 to vector<192x16xf32>
    %6 = arith.addf %5, %4 : vector<192x16xf32>
    %7 = arith.divf %5, %6 : vector<192x16xf32>
    %8 = arith.mulf %2, %7 : vector<192x16xf32>
    %9 = arith.truncf %8 : vector<192x16xf32> to vector<192x16xbf16>
    %c0_3 = arith.constant 0 : index
    %c0_4 = arith.constant 0 : index
    %10 = vector.load %arg9[%c0_3, %c0_4] : memref<16x128xbf16, #tpu.memory_space<vmem>>, vector<16x128xbf16>
    %cst_5 = arith.constant dense<0.000000e+00> : vector<192x128xf32>
    %11 = tpu.matmul %9, %10, %cst_5 {dimension_numbers = #tpu.dot_dimension_numbers<[1], [0], [0], [1], [0, 0, 1, 1], [], []>} : vector<192x16xbf16>, vector<16x128xbf16>, vector<192x128xf32> -> vector<192x128xf32>
    %c0_6 = arith.constant 0 : index
    %c0_7 = arith.constant 0 : index
    %12 = vector.load %arg10[%c0_6, %c0_7] : memref<1x128xf32, #tpu.memory_space<vmem>>, vector<1x128xf32>
    %13 = vector.broadcast %12 : vector<1x128xf32> to vector<192x128xf32>
    %14 = arith.addf %11, %13 : vector<192x128xf32>
    %c0_8 = arith.constant 0 : index
    %c0_9 = arith.constant 0 : index
    %15 = vector.load %arg3[%c0_8, %c0_9] : memref<128x128xbf16, #tpu.memory_space<vmem>>, vector<128x128xbf16>
    %cst_10 = arith.constant dense<0.000000e+00> : vector<192x128xf32>
    %16 = tpu.matmul %1, %15, %cst_10 {dimension_numbers = #tpu.dot_dimension_numbers<[1], [0], [0], [1], [0, 0, 1, 1], [], []>} : vector<192x128xbf16>, vector<128x128xbf16>, vector<192x128xf32> -> vector<192x128xf32>
    %c0_11 = arith.constant 0 : index
    %c0_12 = arith.constant 0 : index
    %17 = vector.load %arg4[%c0_11, %c0_12] : memref<1x128xf32, #tpu.memory_space<vmem>>, vector<1x128xf32>
    %18 = vector.broadcast %17 : vector<1x128xf32> to vector<192x128xf32>
    %19 = arith.mulf %16, %18 : vector<192x128xf32>
    %c0_13 = arith.constant 0 : index
    %c0_14 = arith.constant 0 : index
    %20 = vector.load %arg5[%c0_13, %c0_14] : memref<1x128xf32, #tpu.memory_space<vmem>>, vector<1x128xf32>
    %21 = vector.broadcast %20 : vector<1x128xf32> to vector<192x128xf32>
    %22 = arith.addf %19, %21 : vector<192x128xf32>
    %23 = arith.truncf %22 : vector<192x128xf32> to vector<192x128xbf16>
    %24 = arith.negf %23 : vector<192x128xbf16>
    %25 = math.exp %24 : vector<192x128xbf16>
    %cst_15 = arith.constant 1.000000e+00 : bf16
    %26 = vector.broadcast %cst_15 : bf16 to vector<192x128xbf16>
    %27 = arith.addf %26, %25 : vector<192x128xbf16>
    %28 = arith.divf %26, %27 : vector<192x128xbf16>
    %29 = arith.mulf %23, %28 : vector<192x128xbf16>
    %c0_16 = arith.constant 0 : index
    %c0_17 = arith.constant 0 : index
    %30 = vector.load %arg6[%c0_16, %c0_17] : memref<128x128xbf16, #tpu.memory_space<vmem>>, vector<128x128xbf16>
    %cst_18 = arith.constant dense<0.000000e+00> : vector<192x128xf32>
    %31 = tpu.matmul %29, %30, %cst_18 {dimension_numbers = #tpu.dot_dimension_numbers<[1], [0], [0], [1], [0, 0, 1, 1], [], []>} : vector<192x128xbf16>, vector<128x128xbf16>, vector<192x128xf32> -> vector<192x128xf32>
    %c0_19 = arith.constant 0 : index
    %c0_20 = arith.constant 0 : index
    %32 = vector.load %arg7[%c0_19, %c0_20] : memref<1x128xf32, #tpu.memory_space<vmem>>, vector<1x128xf32>
    %33 = vector.broadcast %32 : vector<1x128xf32> to vector<192x128xf32>
    %34 = arith.mulf %31, %33 : vector<192x128xf32>
    %c0_21 = arith.constant 0 : index
    %c0_22 = arith.constant 0 : index
    %35 = vector.load %arg8[%c0_21, %c0_22] : memref<1x128xf32, #tpu.memory_space<vmem>>, vector<1x128xf32>
    %36 = vector.broadcast %35 : vector<1x128xf32> to vector<192x128xf32>
    %37 = arith.addf %34, %36 : vector<192x128xf32>
    %38 = arith.truncf %37 : vector<192x128xf32> to vector<192x128xbf16>
    %39 = arith.negf %38 : vector<192x128xbf16>
    %40 = math.exp %39 : vector<192x128xbf16>
    %cst_23 = arith.constant 1.000000e+00 : bf16
    %41 = vector.broadcast %cst_23 : bf16 to vector<192x128xbf16>
    %42 = arith.addf %41, %40 : vector<192x128xbf16>
    %43 = arith.divf %41, %42 : vector<192x128xbf16>
    %44 = arith.mulf %38, %43 : vector<192x128xbf16>
    %45 = arith.extf %44 : vector<192x128xbf16> to vector<192x128xf32>
    %46 = arith.addf %45, %14 : vector<192x128xf32>
    %47 = arith.truncf %46 : vector<192x128xf32> to vector<192x128xbf16>
    %48 = arith.negf %47 : vector<192x128xbf16>
    %49 = math.exp %48 : vector<192x128xbf16>
    %cst_24 = arith.constant 1.000000e+00 : bf16
    %50 = vector.broadcast %cst_24 : bf16 to vector<192x128xbf16>
    %51 = arith.addf %50, %49 : vector<192x128xbf16>
    %52 = arith.divf %50, %51 : vector<192x128xbf16>
    %53 = arith.mulf %47, %52 : vector<192x128xbf16>
    %c0_25 = arith.constant 0 : index
    %c0_26 = arith.constant 0 : index
    %54 = vector.load %arg11[%c0_25, %c0_26] : memref<128x128xbf16, #tpu.memory_space<vmem>>, vector<128x128xbf16>
    %cst_27 = arith.constant dense<0.000000e+00> : vector<192x128xf32>
    %55 = tpu.matmul %53, %54, %cst_27 {dimension_numbers = #tpu.dot_dimension_numbers<[1], [0], [0], [1], [0, 0, 1, 1], [], []>} : vector<192x128xbf16>, vector<128x128xbf16>, vector<192x128xf32> -> vector<192x128xf32>
    %c0_28 = arith.constant 0 : index
    %c0_29 = arith.constant 0 : index
    %56 = vector.load %arg12[%c0_28, %c0_29] : memref<1x128xf32, #tpu.memory_space<vmem>>, vector<1x128xf32>
    %57 = vector.broadcast %56 : vector<1x128xf32> to vector<192x128xf32>
    %58 = arith.addf %55, %57 : vector<192x128xf32>
    %59 = arith.addf %0, %58 : vector<192x128xf32>
    %c0_30 = arith.constant 0 : index
    %c0_31 = arith.constant 0 : index
    %60 = vector.load %arg13[%c0_30, %c0_31] : memref<192x128xf32, #tpu.memory_space<vmem>>, vector<192x128xf32>
    tpu.vector_store %arg13[%c0_30, %c0_31], %59 {strides = array<i32>} : memref<192x128xf32, #tpu.memory_space<vmem>>, vector<192x128xf32>,
    return
  }
  func.func @transform_0(%arg0: i32) -> (i32, i32) {
    %c0_i32 = arith.constant 0 : i32
    %c0_i32_0 = arith.constant 0 : i32
    return %arg0, %c0_i32 : i32, i32
  }
  func.func @transform_1(%arg0: i32) -> (i32, i32) {
    %c0_i32 = arith.constant 0 : i32
    %c0_i32_0 = arith.constant 0 : i32
    return %arg0, %c0_i32 : i32, i32
  }
  func.func @transform_2(%arg0: i32) -> (i32, i32) {
    %c0_i32 = arith.constant 0 : i32
    %c0_i32_0 = arith.constant 0 : i32
    %c0_i32_1 = arith.constant 0 : i32
    return %c0_i32, %c0_i32_0 : i32, i32
  }
  func.func @transform_3(%arg0: i32) -> (i32, i32) {
    %c0_i32 = arith.constant 0 : i32
    %c0_i32_0 = arith.constant 0 : i32
    %c0_i32_1 = arith.constant 0 : i32
    return %c0_i32, %c0_i32_0 : i32, i32
  }
  func.func @transform_4(%arg0: i32) -> (i32, i32) {
    %c0_i32 = arith.constant 0 : i32
    %c0_i32_0 = arith.constant 0 : i32
    %c0_i32_1 = arith.constant 0 : i32
    return %c0_i32, %c0_i32_0 : i32, i32
  }
  func.func @transform_5(%arg0: i32) -> (i32, i32) {
    %c0_i32 = arith.constant 0 : i32
    %c0_i32_0 = arith.constant 0 : i32
    %c0_i32_1 = arith.constant 0 : i32
    return %c0_i32, %c0_i32_0 : i32, i32
  }
  func.func @transform_6(%arg0: i32) -> (i32, i32) {
    %c0_i32 = arith.constant 0 : i32
    %c0_i32_0 = arith.constant 0 : i32
    %c0_i32_1 = arith.constant 0 : i32
    return %c0_i32, %c0_i32_0 : i32, i32
  }
  func.func @transform_7(%arg0: i32) -> (i32, i32) {
    %c0_i32 = arith.constant 0 : i32
    %c0_i32_0 = arith.constant 0 : i32
    %c0_i32_1 = arith.constant 0 : i32
    return %c0_i32, %c0_i32_0 : i32, i32
  }
  func.func @transform_8(%arg0: i32) -> (i32, i32) {
    %c0_i32 = arith.constant 0 : i32
    %c0_i32_0 = arith.constant 0 : i32
    %c0_i32_1 = arith.constant 0 : i32
    return %c0_i32, %c0_i32_0 : i32, i32
  }
  func.func @transform_9(%arg0: i32) -> (i32, i32) {
    %c0_i32 = arith.constant 0 : i32
    %c0_i32_0 = arith.constant 0 : i32
    %c0_i32_1 = arith.constant 0 : i32
    return %c0_i32, %c0_i32_0 : i32, i32
  }
  func.func @transform_10(%arg0: i32) -> (i32, i32) {
    %c0_i32 = arith.constant 0 : i32
    %c0_i32_0 = arith.constant 0 : i32
    %c0_i32_1 = arith.constant 0 : i32
    return %c0_i32, %c0_i32_0 : i32, i32
  }
  func.func @transform_11(%arg0: i32) -> (i32, i32) {
    %c0_i32 = arith.constant 0 : i32
    %c0_i32_0 = arith.constant 0 : i32
    %c0_i32_1 = arith.constant 0 : i32
    return %c0_i32, %c0_i32_0 : i32, i32
  }
  func.func @transform_12(%arg0: i32) -> (i32, i32) {
    %c0_i32 = arith.constant 0 : i32
    %c0_i32_0 = arith.constant 0 : i32
    return %arg0, %c0_i32 : i32, i32
  }
}

</mosaic_0001>

<llo_original>
// kernel: tpu_custom_call.1
$region0: #{tpu_custom_call.1}
  #allocation0 [shape = 'u32[]', space=smem, size = 0x4, offset = 0x4, fixed_abs, tag = 'smem constant byte address 0x4 - core index']
  #allocation1 [shape = 'u32[144,128]{1,0:T(1,128)}', space=vmem, size = 0x12000, scoped, tag = 'internal scratch']
  %s0 = inlined_call_operand.vmem [shape: f32[384,128], index: 0, kind: input, shape index: {}]
  %s1 = inlined_call_operand.vmem [shape: f32[384,16], index: 1, kind: input, shape index: {}]
  %s2 = inlined_call_operand.hbm [shape: bf16[128,128], index: 2, kind: input, shape index: {}]
  %s3 = inlined_call_operand.hbm [shape: f32[1,128], index: 3, kind: input, shape index: {}]
  %s4 = inlined_call_operand.hbm [shape: f32[1,128], index: 4, kind: input, shape index: {}]
  %s5 = inlined_call_operand.hbm [shape: bf16[128,128], index: 5, kind: input, shape index: {}]
  %s6 = inlined_call_operand.hbm [shape: f32[1,128], index: 6, kind: input, shape index: {}]
  %s7 = inlined_call_operand.hbm [shape: f32[1,128], index: 7, kind: input, shape index: {}]
  %s8 = inlined_call_operand.hbm [shape: bf16[16,128], index: 8, kind: input, shape index: {}]
  %s9 = inlined_call_operand.hbm [shape: f32[1,128], index: 9, kind: input, shape index: {}]
  %s10 = inlined_call_operand.vmem [shape: bf16[128,128], index: 10, kind: input, shape index: {}]
  %s11 = inlined_call_operand.hbm [shape: f32[1,128], index: 11, kind: input, shape index: {}]
  %s12 = inlined_call_operand.hbm [shape: f32[384,128], index: 12, kind: output, shape index: {}]
  %s13 = sld [smem:[#allocation0]]
  $region117: #{tpu_custom_call.1} parent=0
    _
  %s15 = ssub.s32 1, %s13
  %s16 = scalar_select 0, %s15, %s13
  $region1: #{tpu_custom_call.1} parent=0
    #allocation2 [shape = 'u8[32768]{0}', space=vmem, size = 0x8000, scoped, tag = 'input window, operand 2, single buffered']
    #allocation3 [shape = 's32[2]{0}', space=sflag, size = 0x8, scoped, tag = 'scoped memory for tpu_custom_call.1']
    #allocation4 [shape = 's32[2]{0}', space=sflag, size = 0x8, scoped, tag = 'scoped memory for tpu_custom_call.1']
    #allocation5 [shape = 'u8[512]{0}', space=vmem, size = 0x400, scoped, tag = 'input window, operand 3, single buffered']
    #allocation6 [shape = 's32[1]{0}', space=sflag, size = 0x4, scoped, tag = 'scoped memory for tpu_custom_call.1']
    #allocation7 [shape = 'u8[512]{0}', space=vmem, size = 0x400, scoped, tag = 'input window, operand 4, single buffered']
    #allocation8 [shape = 'u8[32768]{0}', space=vmem, size = 0x8000, scoped, tag = 'input window, operand 5, single buffered']
    #allocation9 [shape = 's32[1]{0}', space=sflag, size = 0x4, scoped, tag = 'scoped memory for tpu_custom_call.1']
    #allocation10 [shape = 'u8[512]{0}', space=vmem, size = 0x400, scoped, tag = 'input window, operand 6, single buffered']
    #allocation11 [shape = 'u8[512]{0}', space=vmem, size = 0x400, scoped, tag = 'input window, operand 7, single buffered']
    #allocation12 [shape = 's32[1]{0}', space=sflag, size = 0x4, scoped, tag = 'scoped memory for tpu_custom_call.1']
    #allocation13 [shape = 'u8[4096]{0}', space=vmem, size = 0x1000, scoped, tag = 'input window, operand 8, single buffered']
    #allocation14 [shape = 'u8[512]{0}', space=vmem, size = 0x400, scoped, tag = 'input window, operand 9, single buffered']
    #allocation15 [shape = 's32[1]{0}', space=sflag, size = 0x4, scoped, tag = 'scoped memory for tpu_custom_call.1']
    #allocation16 [shape = 'u8[512]{0}', space=vmem, size = 0x400, scoped, tag = 'input window, operand 11, single buffered']
    #allocation17 [shape = 'u8[196608]{0}', space=vmem, size = 0x30000, scoped, tag = 'output window, operand 0']
    %17 = vsyncpa [#allocation3], 0
    %18 = vsyncpa [#allocation6], 0
    %19 = vsyncpa [#allocation9], 0
    %20 = vsyncpa [#allocation12], 0
    %21 = vsyncpa [#allocation15], 0
    %22 = vsyncpa [#allocation4], 0
    %s23 = scalar_lea.sflag [#allocation4], 1
    %24 = vsyncpa %s23, 0
    loop: start=0, step=1, limit=4
    $region2: #{tpu_custom_call.1} parent=1 // loop_pre_header
      _
    $region3: #{tpu_custom_call.1} parent=1 // loop_header
      %s26 = sphi 0, %s30
      %p27 = scmp.ge.s32.totalorder %s26, 4
      %s36 = sphi 0, %s38
      %s39 = sphi 0, %s36
      %s40 = sphi 0, %s39
      %s56 = sphi 0, %s40
      %s62 = sphi 0, %s64
      %s65 = sphi 0, %s62
      %s66 = sphi 0, %s65
      %s82 = sphi 0, %s66
      %s86 = sphi 0, %s86
      %s88 = sphi 0, %s86
      %s89 = sphi 0, %s88
      %s103 = sphi 0, %s89
      %s107 = sphi 0, %s107
      %s109 = sphi 0, %s107
      %s110 = sphi 0, %s109
      %s124 = sphi 0, %s110
      %s128 = sphi 0, %s128
      %s130 = sphi 0, %s128
      %s131 = sphi 0, %s130
      %s145 = sphi 0, %s131
      %s149 = sphi 0, %s149
      %s151 = sphi 0, %s149
      %s152 = sphi 0, %s151
      %s166 = sphi 0, %s152
      %s170 = sphi 0, %s170
      %s172 = sphi 0, %s170
      %s173 = sphi 0, %s172
      %s187 = sphi 0, %s173
      %s191 = sphi 0, %s191
      %s193 = sphi 0, %s191
      %s194 = sphi 0, %s193
      %s208 = sphi 0, %s194
      %s212 = sphi 0, %s212
      %s214 = sphi 0, %s212
      %s215 = sphi 0, %s214
      %s229 = sphi 0, %s215
      %s233 = sphi 0, %s233
      %s235 = sphi 0, %s233
      %s236 = sphi 0, %s235
      %s250 = sphi 0, %s236
      %s254 = sphi 0, %s254
      %s256 = sphi 0, %s254
      %s257 = sphi 0, %s256
      %s271 = sphi 0, %s257
      %s275 = sphi 0, %s275
      %s277 = sphi 0, %s275
      %s278 = sphi 0, %s277
      %s292 = sphi 0, %s278
      %s298 = sphi 0, %s300
      %s301 = sphi 0, %s298
      %s302 = sphi 0, %s301
      %s318 = sphi 0, %s302
    $region4: #{tpu_custom_call.1} parent=1 // loop_header_branch
      %29 = sbr.rel (%p27) target = $region8
    $region5: #{tpu_custom_call.1} parent=1 // loop_body
      %s31 = ssub.s32 %s26, 1
      %s32 = ssub.s32 %s26, 2
      %s33 = sadd.s32 %s26, 1
      %s34 = ssub.s32 %s26, %s33
      %p35 = scmp.eq.s32.totalorder %s34, 0
      %s37 = sadd.s32 %s36, 1
      %s38 = scalar_select %p35, %s36, %s37
      %p41 = pneg %p35
      %p42 = scmp.eq.s32.totalorder %s26, 1
      %p43 = por %p41, %p42
      %p44 = scmp.ne.s32.totalorder %s36, %s39
      %p45 = scmp.eq.s32.totalorder %s26, 0
      %p46 = por %p44, %p45
      %p47 = scmp.ne.s32.totalorder %s36, %s39
      %p48 = scmp.eq.s32.totalorder %s31, 1
      %p49 = por %p47, %p48
      %p50 = scmp.ne.s32.totalorder %s39, %s40
      %p51 = scmp.eq.s32.totalorder %s31, 0
      %p52 = por %p50, %p51
      %p53 = scmp.ne.s32.totalorder %s39, %s40
      %p54 = scmp.eq.s32.totalorder %s32, 1
      %p55 = por %p53, %p54
      %p57 = scmp.ne.s32.totalorder %s40, %s56
      %p58 = scmp.eq.s32.totalorder %s32, 0
      %p59 = por %p57, %p58
      %s60 = ssub.s32 %s26, %s33
      %p61 = scmp.eq.s32.totalorder %s60, 0
      %s63 = sadd.s32 %s62, 1
      %s64 = scalar_select %p61, %s62, %s63
      %p67 = pneg %p61
      %p68 = scmp.eq.s32.totalorder %s26, 1
      %p69 = por %p67, %p68
      %p70 = scmp.ne.s32.totalorder %s62, %s65
      %p71 = scmp.eq.s32.totalorder %s26, 0
      %p72 = por %p70, %p71
      %p73 = scmp.ne.s32.totalorder %s62, %s65
      %p74 = scmp.eq.s32.totalorder %s31, 1
      %p75 = por %p73, %p74
      %p76 = scmp.ne.s32.totalorder %s65, %s66
      %p77 = scmp.eq.s32.totalorder %s31, 0
      %p78 = por %p76, %p77
      %p79 = scmp.ne.s32.totalorder %s65, %s66
      %p80 = scmp.eq.s32.totalorder %s32, 1
      %p81 = por %p79, %p80
      %p83 = scmp.ne.s32.totalorder %s66, %s82
      %p84 = scmp.eq.s32.totalorder %s32, 0
      %p85 = por %p83, %p84
      %s87 = sadd.s32 %s86, 1
      %p90 = scmp.eq.s32.totalorder %s26, 1
      %p91 = scmp.ne.s32.totalorder %s86, %s88
      %p92 = scmp.eq.s32.totalorder %s26, 0
      %p93 = por %p91, %p92
      %p94 = scmp.ne.s32.totalorder %s86, %s88
      %p95 = scmp.eq.s32.totalorder %s31, 1
      %p96 = por %p94, %p95
      %p97 = scmp.ne.s32.totalorder %s88, %s89
      %p98 = scmp.eq.s32.totalorder %s31, 0
      %p99 = por %p97, %p98
      %p100 = scmp.ne.s32.totalorder %s88, %s89
      %p101 = scmp.eq.s32.totalorder %s32, 1
      %p102 = por %p100, %p101
      %p104 = scmp.ne.s32.totalorder %s89, %s103
      %p105 = scmp.eq.s32.totalorder %s32, 0
      %p106 = por %p104, %p105
      %s108 = sadd.s32 %s107, 1
      %p111 = scmp.eq.s32.totalorder %s26, 1
      %p112 = scmp.ne.s32.totalorder %s107, %s109
      %p113 = scmp.eq.s32.totalorder %s26, 0
      %p114 = por %p112, %p113
      %p115 = scmp.ne.s32.totalorder %s107, %s109
      %p116 = scmp.eq.s32.totalorder %s31, 1
      %p117 = por %p115, %p116
      %p118 = scmp.ne.s32.totalorder %s109, %s110
      %p119 = scmp.eq.s32.totalorder %s31, 0
      %p120 = por %p118, %p119
      %p121 = scmp.ne.s32.totalorder %s109, %s110
      %p122 = scmp.eq.s32.totalorder %s32, 1
      %p123 = por %p121, %p122
      %p125 = scmp.ne.s32.totalorder %s110, %s124
      %p126 = scmp.eq.s32.totalorder %s32, 0
      %p127 = por %p125, %p126
      %s129 = sadd.s32 %s128, 1
      %p132 = scmp.eq.s32.totalorder %s26, 1
      %p133 = scmp.ne.s32.totalorder %s128, %s130
      %p134 = scmp.eq.s32.totalorder %s26, 0
      %p135 = por %p133, %p134
      %p136 = scmp.ne.s32.totalorder %s128, %s130
      %p137 = scmp.eq.s32.totalorder %s31, 1
      %p138 = por %p136, %p137
      %p139 = scmp.ne.s32.totalorder %s130, %s131
      %p140 = scmp.eq.s32.totalorder %s31, 0
      %p141 = por %p139, %p140
      %p142 = scmp.ne.s32.totalorder %s130, %s131
      %p143 = scmp.eq.s32.totalorder %s32, 1
      %p144 = por %p142, %p143
      %p146 = scmp.ne.s32.totalorder %s131, %s145
      %p147 = scmp.eq.s32.totalorder %s32, 0
      %p148 = por %p146, %p147
      %s150 = sadd.s32 %s149, 1
      %p153 = scmp.eq.s32.totalorder %s26, 1
      %p154 = scmp.ne.s32.totalorder %s149, %s151
      %p155 = scmp.eq.s32.totalorder %s26, 0
      %p156 = por %p154, %p155
      %p157 = scmp.ne.s32.totalorder %s149, %s151
      %p158 = scmp.eq.s32.totalorder %s31, 1
      %p159 = por %p157, %p158
      %p160 = scmp.ne.s32.totalorder %s151, %s152
      %p161 = scmp.eq.s32.totalorder %s31, 0
      %p162 = por %p160, %p161
      %p163 = scmp.ne.s32.totalorder %s151, %s152
      %p164 = scmp.eq.s32.totalorder %s32, 1
      %p165 = por %p163, %p164
      %p167 = scmp.ne.s32.totalorder %s152, %s166
      %p168 = scmp.eq.s32.totalorder %s32, 0
      %p169 = por %p167, %p168
      %s171 = sadd.s32 %s170, 1
      %p174 = scmp.eq.s32.totalorder %s26, 1
      %p175 = scmp.ne.s32.totalorder %s170, %s172
      %p176 = scmp.eq.s32.totalorder %s26, 0
      %p177 = por %p175, %p176
      %p178 = scmp.ne.s32.totalorder %s170, %s172
      %p179 = scmp.eq.s32.totalorder %s31, 1
      %p180 = por %p178, %p179
      %p181 = scmp.ne.s32.totalorder %s172, %s173
      %p182 = scmp.eq.s32.totalorder %s31, 0
      %p183 = por %p181, %p182
      %p184 = scmp.ne.s32.totalorder %s172, %s173
      %p185 = scmp.eq.s32.totalorder %s32, 1
      %p186 = por %p184, %p185
      %p188 = scmp.ne.s32.totalorder %s173, %s187
      %p189 = scmp.eq.s32.totalorder %s32, 0
      %p190 = por %p188, %p189
      %s192 = sadd.s32 %s191, 1
      %p195 = scmp.eq.s32.totalorder %s26, 1
      %p196 = scmp.ne.s32.totalorder %s191, %s193
      %p197 = scmp.eq.s32.totalorder %s26, 0
      %p198 = por %p196, %p197
      %p199 = scmp.ne.s32.totalorder %s191, %s193
      %p200 = scmp.eq.s32.totalorder %s31, 1
      %p201 = por %p199, %p200
      %p202 = scmp.ne.s32.totalorder %s193, %s194
      %p203 = scmp.eq.s32.totalorder %s31, 0
      %p204 = por %p202, %p203
      %p205 = scmp.ne.s32.totalorder %s193, %s194
      %p206 = scmp.eq.s32.totalorder %s32, 1
      %p207 = por %p205, %p206
      %p209 = scmp.ne.s32.totalorder %s194, %s208
      %p210 = scmp.eq.s32.totalorder %s32, 0
      %p211 = por %p209, %p210
      %s213 = sadd.s32 %s212, 1
      %p216 = scmp.eq.s32.totalorder %s26, 1
      %p217 = scmp.ne.s32.totalorder %s212, %s214
      %p218 = scmp.eq.s32.totalorder %s26, 0
      %p219 = por %p217, %p218
      %p220 = scmp.ne.s32.totalorder %s212, %s214
      %p221 = scmp.eq.s32.totalorder %s31, 1
      %p222 = por %p220, %p221
      %p223 = scmp.ne.s32.totalorder %s214, %s215
      %p224 = scmp.eq.s32.totalorder %s31, 0
      %p225 = por %p223, %p224
      %p226 = scmp.ne.s32.totalorder %s214, %s215
      %p227 = scmp.eq.s32.totalorder %s32, 1
      %p228 = por %p226, %p227
      %p230 = scmp.ne.s32.totalorder %s215, %s229
      %p231 = scmp.eq.s32.totalorder %s32, 0
      %p232 = por %p230, %p231
      %s234 = sadd.s32 %s233, 1
      %p237 = scmp.eq.s32.totalorder %s26, 1
      %p238 = scmp.ne.s32.totalorder %s233, %s235
      %p239 = scmp.eq.s32.totalorder %s26, 0
      %p240 = por %p238, %p239
      %p241 = scmp.ne.s32.totalorder %s233, %s235
      %p242 = scmp.eq.s32.totalorder %s31, 1
      %p243 = por %p241, %p242
      %p244 = scmp.ne.s32.totalorder %s235, %s236
      %p245 = scmp.eq.s32.totalorder %s31, 0
      %p246 = por %p244, %p245
      %p247 = scmp.ne.s32.totalorder %s235, %s236
      %p248 = scmp.eq.s32.totalorder %s32, 1
      %p249 = por %p247, %p248
      %p251 = scmp.ne.s32.totalorder %s236, %s250
      %p252 = scmp.eq.s32.totalorder %s32, 0
      %p253 = por %p251, %p252
      %s255 = sadd.s32 %s254, 1
      %p258 = scmp.eq.s32.totalorder %s26, 1
      %p259 = scmp.ne.s32.totalorder %s254, %s256
      %p260 = scmp.eq.s32.totalorder %s26, 0
      %p261 = por %p259, %p260
      %p262 = scmp.ne.s32.totalorder %s254, %s256
      %p263 = scmp.eq.s32.totalorder %s31, 1
      %p264 = por %p262, %p263
      %p265 = scmp.ne.s32.totalorder %s256, %s257
      %p266 = scmp.eq.s32.totalorder %s31, 0
      %p267 = por %p265, %p266
      %p268 = scmp.ne.s32.totalorder %s256, %s257
      %p269 = scmp.eq.s32.totalorder %s32, 1
      %p270 = por %p268, %p269
      %p272 = scmp.ne.s32.totalorder %s257, %s271
      %p273 = scmp.eq.s32.totalorder %s32, 0
      %p274 = por %p272, %p273
      %s276 = sadd.s32 %s275, 1
      %p279 = scmp.eq.s32.totalorder %s26, 1
      %p280 = scmp.ne.s32.totalorder %s275, %s277
      %p281 = scmp.eq.s32.totalorder %s26, 0
      %p282 = por %p280, %p281
      %p283 = scmp.ne.s32.totalorder %s275, %s277
      %p284 = scmp.eq.s32.totalorder %s31, 1
      %p285 = por %p283, %p284
      %p286 = scmp.ne.s32.totalorder %s277, %s278
      %p287 = scmp.eq.s32.totalorder %s31, 0
      %p288 = por %p286, %p287
      %p289 = scmp.ne.s32.totalorder %s277, %s278
      %p290 = scmp.eq.s32.totalorder %s32, 1
      %p291 = por %p289, %p290
      %p293 = scmp.ne.s32.totalorder %s278, %s292
      %p294 = scmp.eq.s32.totalorder %s32, 0
      %p295 = por %p293, %p294
      %s296 = ssub.s32 %s26, %s33
      %p297 = scmp.eq.s32.totalorder %s296, 0
      %s299 = sadd.s32 %s298, 1
      %s300 = scalar_select %p297, %s298, %s299
      %p303 = pneg %p297
      %p304 = scmp.eq.s32.totalorder %s26, 1
      %p305 = por %p303, %p304
      %p306 = scmp.ne.s32.totalorder %s298, %s301
      %p307 = scmp.eq.s32.totalorder %s26, 0
      %p308 = por %p306, %p307
      %p309 = scmp.ne.s32.totalorder %s298, %s301
      %p310 = scmp.eq.s32.totalorder %s31, 1
      %p311 = por %p309, %p310
      %p312 = scmp.ne.s32.totalorder %s301, %s302
      %p313 = scmp.eq.s32.totalorder %s31, 0
      %p314 = por %p312, %p313
      %p315 = scmp.ne.s32.totalorder %s301, %s302
      %p316 = scmp.eq.s32.totalorder %s32, 1
      %p317 = por %p315, %p316
      %p319 = scmp.ne.s32.totalorder %s302, %s318
      %p320 = scmp.eq.s32.totalorder %s32, 0
      %p321 = por %p319, %p320
      %p322 = scmp.le.s32.totalorder 1, %s26
      %p323 = scmp.lt.s32.totalorder %s26, 3
      %p324 = pnand %p322, %p323
      %p325 = pneg %p324
      // Predicated region
      $region9: #{tpu_custom_call.1} parent=5 // pred_check
        _
      $region10: #{tpu_custom_call.1} parent=5 // pred_check_branch
        %327 = sbr.rel (%p324) target = $region12
      $region11: #{tpu_custom_call.1} parent=5 // pred_region
        %s328 = ssub.s32 %s26, 1
        // Predicated region
        $region13: #{tpu_custom_call.1} parent=11 // pred_check
          %p329 = pneg %p99
        $region14: #{tpu_custom_call.1} parent=11 // pred_check_branch
          %331 = sbr.rel (%p329) target = $region16
        $region15: #{tpu_custom_call.1} parent=11 // pred_region
          %s333 = ssub.s32 1024, 1024
          %334 = vsyncadd [#allocation3], %s333
          %s335 = sshll.u32 [#allocation2], 4
          %s336 = int_to_ptr.vmem [resolvable:$true] %s335
          %341 = dma.hbm_to_vmem [thread:$0]  %s2, 1024, %s336, [#allocation3], 64, 64, 4
        $region16: #{tpu_custom_call.1} parent=11 // pred_fallthru
          _
        // Predicated region
        $region17: #{tpu_custom_call.1} parent=11 // pred_check
          %p342 = pneg %p120
        $region18: #{tpu_custom_call.1} parent=11 // pred_check_branch
          %344 = sbr.rel (%p342) target = $region20
        $region19: #{tpu_custom_call.1} parent=11 // pred_region
          %s346 = ssub.s32 16, 16
          %347 = vsyncadd [#allocation6], %s346
          %s349 = sshll.u32 [#allocation5], 4
          %s350 = int_to_ptr.vmem [resolvable:$true] %s349
          %352 = dma.hbm_to_vmem [thread:$0]  %s3, 16, %s350, [#allocation6]
        $region20: #{tpu_custom_call.1} parent=11 // pred_fallthru
          _
        // Predicated region
        $region21: #{tpu_custom_call.1} parent=11 // pred_check
          %p353 = pneg %p141
        $region22: #{tpu_custom_call.1} parent=11 // pred_check_branch
          %355 = sbr.rel (%p353) target = $region24
        $region23: #{tpu_custom_call.1} parent=11 // pred_region
          %s357 = ssub.s32 16, 16
          %358 = vsyncadd [#allocation6], %s357
          %s360 = sshll.u32 [#allocation7], 4
          %s361 = int_to_ptr.vmem [resolvable:$true] %s360
          %363 = dma.hbm_to_vmem [thread:$0]  %s4, 16, %s361, [#allocation6]
        $region24: #{tpu_custom_call.1} parent=11 // pred_fallthru
          _
        // Predicated region
        $region25: #{tpu_custom_call.1} parent=11 // pred_check
          %p364 = pneg %p162
        $region26: #{tpu_custom_call.1} parent=11 // pred_check_branch
          %366 = sbr.rel (%p364) target = $region28
        $region27: #{tpu_custom_call.1} parent=11 // pred_region
          %s368 = ssub.s32 1024, 1024
          %369 = vsyncadd [#allocation9], %s368
          %s370 = sshll.u32 [#allocation8], 4
          %s371 = int_to_ptr.vmem [resolvable:$true] %s370
          %376 = dma.hbm_to_vmem [thread:$0]  %s5, 1024, %s371, [#allocation9], 64, 64, 4
        $region28: #{tpu_custom_call.1} parent=11 // pred_fallthru
          _
        // Predicated region
        $region29: #{tpu_custom_call.1} parent=11 // pred_check
          %p377 = pneg %p183
        $region30: #{tpu_custom_call.1} parent=11 // pred_check_branch
          %379 = sbr.rel (%p377) target = $region32
        $region31: #{tpu_custom_call.1} parent=11 // pred_region
          %s381 = ssub.s32 16, 16
          %382 = vsyncadd [#allocation9], %s381
          %s384 = sshll.u32 [#allocation10], 4
          %s385 = int_to_ptr.vmem [resolvable:$true] %s384
          %387 = dma.hbm_to_vmem [thread:$0]  %s6, 16, %s385, [#allocation9]
        $region32: #{tpu_custom_call.1} parent=11 // pred_fallthru
          _
        // Predicated region
        $region33: #{tpu_custom_call.1} parent=11 // pred_check
          %p388 = pneg %p204
        $region34: #{tpu_custom_call.1} parent=11 // pred_check_branch
          %390 = sbr.rel (%p388) target = $region36
        $region35: #{tpu_custom_call.1} parent=11 // pred_region
          %s392 = ssub.s32 16, 16
          %393 = vsyncadd [#allocation12], %s392
          %s395 = sshll.u32 [#allocation11], 4
          %s396 = int_to_ptr.vmem [resolvable:$true] %s395
          %398 = dma.hbm_to_vmem [thread:$0]  %s7, 16, %s396, [#allocation12]
        $region36: #{tpu_custom_call.1} parent=11 // pred_fallthru
          _
        // Predicated region
        $region37: #{tpu_custom_call.1} parent=11 // pred_check
          %p399 = pneg %p225
        $region38: #{tpu_custom_call.1} parent=11 // pred_check_branch
          %401 = sbr.rel (%p399) target = $region40
        $region39: #{tpu_custom_call.1} parent=11 // pred_region
          %s403 = ssub.s32 128, 128
          %404 = vsyncadd [#allocation12], %s403
          %s405 = sshll.u32 [#allocation13], 4
          %s406 = int_to_ptr.vmem [resolvable:$true] %s405
          %411 = dma.hbm_to_vmem [thread:$0]  %s8, 128, %s406, [#allocation12], 64, 64, 4
        $region40: #{tpu_custom_call.1} parent=11 // pred_fallthru
          _
        // Predicated region
        $region41: #{tpu_custom_call.1} parent=11 // pred_check
          %p412 = pneg %p246
        $region42: #{tpu_custom_call.1} parent=11 // pred_check_branch
          %414 = sbr.rel (%p412) target = $region44
        $region43: #{tpu_custom_call.1} parent=11 // pred_region
          %s416 = ssub.s32 16, 16
          %417 = vsyncadd [#allocation15], %s416
          %s419 = sshll.u32 [#allocation14], 4
          %s420 = int_to_ptr.vmem [resolvable:$true] %s419
          %422 = dma.hbm_to_vmem [thread:$0]  %s9, 16, %s420, [#allocation15]
        $region44: #{tpu_custom_call.1} parent=11 // pred_fallthru
          _
        // Predicated region
        $region45: #{tpu_custom_call.1} parent=11 // pred_check
          %p423 = pneg %p267
        $region46: #{tpu_custom_call.1} parent=11 // pred_check_branch
          %425 = sbr.rel (%p423) target = $region48
        $region47: #{tpu_custom_call.1} parent=11 // pred_region
          _
        $region48: #{tpu_custom_call.1} parent=11 // pred_fallthru
          _
        // Predicated region
        $region49: #{tpu_custom_call.1} parent=11 // pred_check
          %p426 = pneg %p288
        $region50: #{tpu_custom_call.1} parent=11 // pred_check_branch
          %428 = sbr.rel (%p426) target = $region52
        $region51: #{tpu_custom_call.1} parent=11 // pred_region
          %s430 = ssub.s32 16, 16
          %431 = vsyncadd [#allocation15], %s430
          %s433 = sshll.u32 [#allocation16], 4
          %s434 = int_to_ptr.vmem [resolvable:$true] %s433
          %436 = dma.hbm_to_vmem [thread:$0]  %s11, 16, %s434, [#allocation15]
        $region52: #{tpu_custom_call.1} parent=11 // pred_fallthru
          _
      $region12: #{tpu_custom_call.1} parent=5 // pred_fallthru
        _
      %p437 = scmp.lt.s32.totalorder %s26, 2
      // Predicated region
      $region53: #{tpu_custom_call.1} parent=5 // pred_check
        %p438 = pneg %p437
      $region54: #{tpu_custom_call.1} parent=5 // pred_check_branch
        %440 = sbr.rel (%p438) target = $region56
      $region55: #{tpu_custom_call.1} parent=5 // pred_region
        // Predicated region
        $region57: #{tpu_custom_call.1} parent=55 // pred_check
          %p441 = pneg %p46
        $region58: #{tpu_custom_call.1} parent=55 // pred_check_branch
          %443 = sbr.rel (%p441) target = $region60
        $region59: #{tpu_custom_call.1} parent=55 // pred_region
          %s444 = smul.u32 24, %s26
          %p445 = scmp.lt.s32.totalorder %s444, 47
          %s446 = scalar_select %p445, %s444, 47
          %s447 = smul.addr %s446, 8
          %s448 = scalar_lea.vmem %s0, %s447
          %s449 = smul.u32 24, %s26
        $region60: #{tpu_custom_call.1} parent=55 // pred_fallthru
          _
        // Predicated region
        $region61: #{tpu_custom_call.1} parent=55 // pred_check
          %p450 = pneg %p72
        $region62: #{tpu_custom_call.1} parent=55 // pred_check_branch
          %452 = sbr.rel (%p450) target = $region64
        $region63: #{tpu_custom_call.1} parent=55 // pred_region
          %s453 = smul.u32 24, %s26
          %p454 = scmp.lt.s32.totalorder %s453, 47
          %s455 = scalar_select %p454, %s453, 47
          %s456 = smul.addr %s455, 8
          %s457 = scalar_lea.vmem %s1, %s456
          %s458 = smul.u32 24, %s26
        $region64: #{tpu_custom_call.1} parent=55 // pred_fallthru
          _
      $region56: #{tpu_custom_call.1} parent=5 // pred_fallthru
        _
      %p459 = scmp.le.s32.totalorder 1, %s26
      %p460 = scmp.lt.s32.totalorder %s26, 3
      %p461 = pnand %p459, %p460
      %p462 = pneg %p461
      // Predicated region
      $region65: #{tpu_custom_call.1} parent=5 // pred_check
        _
      $region66: #{tpu_custom_call.1} parent=5 // pred_check_branch
        %464 = sbr.rel (%p461) target = $region68
      $region67: #{tpu_custom_call.1} parent=5 // pred_region
        %s465 = ssub.s32 %s26, 1
        // Predicated region
        $region69: #{tpu_custom_call.1} parent=67 // pred_check
          %p466 = pneg %p99
        $region70: #{tpu_custom_call.1} parent=67 // pred_check_branch
          %468 = sbr.rel (%p466) target = $region72
        $region71: #{tpu_custom_call.1} parent=67 // pred_region
          %469 = dma.done [#allocation3], 1024
        $region72: #{tpu_custom_call.1} parent=67 // pred_fallthru
          _
        // Predicated region
        $region73: #{tpu_custom_call.1} parent=67 // pred_check
          %p470 = pneg %p120
        $region74: #{tpu_custom_call.1} parent=67 // pred_check_branch
          %472 = sbr.rel (%p470) target = $region76
        $region75: #{tpu_custom_call.1} parent=67 // pred_region
          %473 = dma.done [#allocation6], 16
        $region76: #{tpu_custom_call.1} parent=67 // pred_fallthru
          _
        // Predicated region
        $region77: #{tpu_custom_call.1} parent=67 // pred_check
          %p474 = pneg %p141
        $region78: #{tpu_custom_call.1} parent=67 // pred_check_branch
          %476 = sbr.rel (%p474) target = $region80
        $region79: #{tpu_custom_call.1} parent=67 // pred_region
          %477 = dma.done [#allocation6], 16
        $region80: #{tpu_custom_call.1} parent=67 // pred_fallthru
          _
        // Predicated region
        $region81: #{tpu_custom_call.1} parent=67 // pred_check
          %p478 = pneg %p162
        $region82: #{tpu_custom_call.1} parent=67 // pred_check_branch
          %480 = sbr.rel (%p478) target = $region84
        $region83: #{tpu_custom_call.1} parent=67 // pred_region
          %481 = dma.done [#allocation9], 1024
        $region84: #{tpu_custom_call.1} parent=67 // pred_fallthru
          _
        // Predicated region
        $region85: #{tpu_custom_call.1} parent=67 // pred_check
          %p482 = pneg %p183
        $region86: #{tpu_custom_call.1} parent=67 // pred_check_branch
          %484 = sbr.rel (%p482) target = $region88
        $region87: #{tpu_custom_call.1} parent=67 // pred_region
          %485 = dma.done [#allocation9], 16
        $region88: #{tpu_custom_call.1} parent=67 // pred_fallthru
          _
        // Predicated region
        $region89: #{tpu_custom_call.1} parent=67 // pred_check
          %p486 = pneg %p204
        $region90: #{tpu_custom_call.1} parent=67 // pred_check_branch
          %488 = sbr.rel (%p486) target = $region92
        $region91: #{tpu_custom_call.1} parent=67 // pred_region
          %489 = dma.done [#allocation12], 16
        $region92: #{tpu_custom_call.1} parent=67 // pred_fallthru
          _
        // Predicated region
        $region93: #{tpu_custom_call.1} parent=67 // pred_check
          %p490 = pneg %p225
        $region94: #{tpu_custom_call.1} parent=67 // pred_check_branch
          %492 = sbr.rel (%p490) target = $region96
        $region95: #{tpu_custom_call.1} parent=67 // pred_region
          %493 = dma.done [#allocation12], 128
        $region96: #{tpu_custom_call.1} parent=67 // pred_fallthru
          _
        // Predicated region
        $region97: #{tpu_custom_call.1} parent=67 // pred_check
          %p494 = pneg %p246
        $region98: #{tpu_custom_call.1} parent=67 // pred_check_branch
          %496 = sbr.rel (%p494) target = $region100
        $region99: #{tpu_custom_call.1} parent=67 // pred_region
          %497 = dma.done [#allocation15], 16
        $region100: #{tpu_custom_call.1} parent=67 // pred_fallthru
          _
        // Predicated region
        $region101: #{tpu_custom_call.1} parent=67 // pred_check
          %p498 = pneg %p288
        $region102: #{tpu_custom_call.1} parent=67 // pred_check_branch
          %500 = sbr.rel (%p498) target = $region104
        $region103: #{tpu_custom_call.1} parent=67 // pred_region
          %501 = dma.done [#allocation15], 16
        $region104: #{tpu_custom_call.1} parent=67 // pred_fallthru
          _
        %s502 = smul.u32 24, %s31
        %p503 = scmp.lt.s32.totalorder %s502, 47
        %s504 = scalar_select %p503, %s502, 47
        %s505 = smul.addr %s504, 8
        %s506 = scalar_lea.vmem %s0, %s505
        %p507 = pneg %p52
        %p508 = pneg %p49
        %s509 = smul.u32 24, %s31
        %p510 = scmp.lt.s32.totalorder %s509, 47
        %s511 = scalar_select %p510, %s509, 47
        %s512 = smul.addr %s511, 8
        %s513 = scalar_lea.vmem %s1, %s512
        %p514 = pneg %p78
        %p515 = pneg %p75
        %p516 = pneg %p99
        %p517 = pneg %p96
        %p518 = pneg %p120
        %p519 = pneg %p117
        %p520 = pneg %p141
        %p521 = pneg %p138
        %p522 = pneg %p162
        %p523 = pneg %p159
        %p524 = pneg %p183
        %p525 = pneg %p180
        %p526 = pneg %p204
        %p527 = pneg %p201
        %p528 = pneg %p225
        %p529 = pneg %p222
        %p530 = pneg %p246
        %p531 = pneg %p243
        %p532 = pneg %p267
        %p533 = pneg %p264
        %p534 = pneg %p288
        %p535 = pneg %p285
        %p536 = pneg %p314
        %p537 = pneg %p311
        %s538 = sand.u32 %s301, 1
        %s539 = scalar_lea.sflag [#allocation4], %s538
        %s540 = sand.u32 %s301, 1
        %s541 = smul.addr %s540, 192
        %s542 = scalar_lea.vmem [#allocation17], %s541
        %s543 = smul.u32 24, %s31
        %p544 = scmp.lt.s32.totalorder %s543, 47
        %s545 = scalar_select %p544, %s543, 47
        %s546 = smul.addr %s545, 8
        %s547 = scalar_lea.vmem %s0, %s546
        %s548 = smul.u32 24, %s31
        %s549 = smul.u32 24, %s31
        %p550 = scmp.lt.s32.totalorder %s549, 47
        %s551 = scalar_select %p550, %s549, 47
        %s552 = smul.addr %s551, 8
        %s553 = scalar_lea.vmem %s1, %s552
        %s554 = smul.u32 24, %s31
        %s555 = smul.u32 24, %s31
        %v558 = vld [vmem:[%s547] sm:$0xff]
        %v559 = vld [vmem:[%s547 + $0x8] sm:$0xff]
        %v560 = vld [vmem:[%s547 + $0x10] sm:$0xff]
        %v561 = vld [vmem:[%s547 + $0x18] sm:$0xff]
        %v562 = vld [vmem:[%s547 + $0x20] sm:$0xff]
        %v563 = vld [vmem:[%s547 + $0x28] sm:$0xff]
        %v564 = vld [vmem:[%s547 + $0x30] sm:$0xff]
        %v565 = vld [vmem:[%s547 + $0x38] sm:$0xff]
        %v566 = vld [vmem:[%s547 + $0x40] sm:$0xff]
        %v567 = vld [vmem:[%s547 + $0x48] sm:$0xff]
        %v568 = vld [vmem:[%s547 + $0x50] sm:$0xff]
        %v569 = vld [vmem:[%s547 + $0x58] sm:$0xff]
        %v570 = vld [vmem:[%s547 + $0x60] sm:$0xff]
        %v571 = vld [vmem:[%s547 + $0x68] sm:$0xff]
        %v572 = vld [vmem:[%s547 + $0x70] sm:$0xff]
        %v573 = vld [vmem:[%s547 + $0x78] sm:$0xff]
        %v574 = vld [vmem:[%s547 + $0x80] sm:$0xff]
        %v575 = vld [vmem:[%s547 + $0x88] sm:$0xff]
        %v576 = vld [vmem:[%s547 + $0x90] sm:$0xff]
        %v577 = vld [vmem:[%s547 + $0x98] sm:$0xff]
        %v578 = vld [vmem:[%s547 + $0xa0] sm:$0xff]
        %v579 = vld [vmem:[%s547 + $0xa8] sm:$0xff]
        %v580 = vld [vmem:[%s547 + $0xb0] sm:$0xff]
        %v581 = vld [vmem:[%s547 + $0xb8] sm:$0xff]
        %v582 = vpack.c.bf16 %v559, %v558
        %v583 = vpack.c.bf16 %v561, %v560
        %v584 = vpack.c.bf16 %v563, %v562
        %v585 = vpack.c.bf16 %v565, %v564
        %v586 = vpack.c.bf16 %v567, %v566
        %v587 = vpack.c.bf16 %v569, %v568
        %v588 = vpack.c.bf16 %v571, %v570
        %v589 = vpack.c.bf16 %v573, %v572
        %v590 = vpack.c.bf16 %v575, %v574
        %v591 = vpack.c.bf16 %v577, %v576
        %v592 = vpack.c.bf16 %v579, %v578
        %v593 = vpack.c.bf16 %v581, %v580
        %v594 = vld [vmem:[%s553] sm:$0xff]
        %v595 = vld [vmem:[%s553 + $0x8] sm:$0xff]
        %v596 = vld [vmem:[%s553 + $0x10] sm:$0xff]
        %v597 = vld [vmem:[%s553 + $0x18] sm:$0xff]
        %v598 = vld [vmem:[%s553 + $0x20] sm:$0xff]
        %v599 = vld [vmem:[%s553 + $0x28] sm:$0xff]
        %v600 = vld [vmem:[%s553 + $0x30] sm:$0xff]
        %v601 = vld [vmem:[%s553 + $0x38] sm:$0xff]
        %v602 = vld [vmem:[%s553 + $0x40] sm:$0xff]
        %v603 = vld [vmem:[%s553 + $0x48] sm:$0xff]
        %v604 = vld [vmem:[%s553 + $0x50] sm:$0xff]
        %v605 = vld [vmem:[%s553 + $0x58] sm:$0xff]
        %v606 = vld [vmem:[%s553 + $0x60] sm:$0xff]
        %v607 = vld [vmem:[%s553 + $0x68] sm:$0xff]
        %v608 = vld [vmem:[%s553 + $0x70] sm:$0xff]
        %v609 = vld [vmem:[%s553 + $0x78] sm:$0xff]
        %v610 = vld [vmem:[%s553 + $0x80] sm:$0xff]
        %v611 = vld [vmem:[%s553 + $0x88] sm:$0xff]
        %v612 = vld [vmem:[%s553 + $0x90] sm:$0xff]
        %v613 = vld [vmem:[%s553 + $0x98] sm:$0xff]
        %v614 = vld [vmem:[%s553 + $0xa0] sm:$0xff]
        %v615 = vld [vmem:[%s553 + $0xa8] sm:$0xff]
        %v616 = vld [vmem:[%s553 + $0xb0] sm:$0xff]
        %v617 = vld [vmem:[%s553 + $0xb8] sm:$0xff]
        %v618 = vxor.u32 %v594, 2147483648
        %v619 = vxor.u32 %v595, 2147483648
        %v620 = vxor.u32 %v596, 2147483648
        %v621 = vxor.u32 %v597, 2147483648
        %v622 = vxor.u32 %v598, 2147483648
        %v623 = vxor.u32 %v599, 2147483648
        %v624 = vxor.u32 %v600, 2147483648
        %v625 = vxor.u32 %v601, 2147483648
        %v626 = vxor.u32 %v602, 2147483648
        %v627 = vxor.u32 %v603, 2147483648
        %v628 = vxor.u32 %v604, 2147483648
        %v629 = vxor.u32 %v605, 2147483648
        %v630 = vxor.u32 %v606, 2147483648
        %v631 = vxor.u32 %v607, 2147483648
        %v632 = vxor.u32 %v608, 2147483648
        %v633 = vxor.u32 %v609, 2147483648
        %v634 = vxor.u32 %v610, 2147483648
        %v635 = vxor.u32 %v611, 2147483648
        %v636 = vxor.u32 %v612, 2147483648
        %v637 = vxor.u32 %v613, 2147483648
        %v638 = vxor.u32 %v614, 2147483648
        %v639 = vxor.u32 %v615, 2147483648
        %v640 = vxor.u32 %v616, 2147483648
        %v641 = vxor.u32 %v617, 2147483648
        %v642 = vmul.f32 %v618, 1.442695
        %v643 = vpow.pop %v642
        %v644 = vmul.f32 %v619, 1.442695
        %v645 = vpow.pop %v644
        %v646 = vmul.f32 %v620, 1.442695
        %v647 = vpow.pop %v646
        %v648 = vmul.f32 %v621, 1.442695
        %v649 = vpow.pop %v648
        %v650 = vmul.f32 %v622, 1.442695
        %v651 = vpow.pop %v650
        %v652 = vmul.f32 %v623, 1.442695
        %v653 = vpow.pop %v652
        %v654 = vmul.f32 %v624, 1.442695
        %v655 = vpow.pop %v654
        %v656 = vmul.f32 %v625, 1.442695
        %v657 = vpow.pop %v656
        %v658 = vmul.f32 %v626, 1.442695
        %v659 = vpow.pop %v658
        %v660 = vmul.f32 %v627, 1.442695
        %v661 = vpow.pop %v660
        %v662 = vmul.f32 %v628, 1.442695
        %v663 = vpow.pop %v662
        %v664 = vmul.f32 %v629, 1.442695
        %v665 = vpow.pop %v664
        %v666 = vmul.f32 %v630, 1.442695
        %v667 = vpow.pop %v666
        %v668 = vmul.f32 %v631, 1.442695
        %v669 = vpow.pop %v668
        %v670 = vmul.f32 %v632, 1.442695
        %v671 = vpow.pop %v670
        %v672 = vmul.f32 %v633, 1.442695
        %v673 = vpow.pop %v672
        %v674 = vmul.f32 %v634, 1.442695
        %v675 = vpow.pop %v674
        %v676 = vmul.f32 %v635, 1.442695
        %v677 = vpow.pop %v676
        %v678 = vmul.f32 %v636, 1.442695
        %v679 = vpow.pop %v678
        %v680 = vmul.f32 %v637, 1.442695
        %v681 = vpow.pop %v680
        %v682 = vmul.f32 %v638, 1.442695
        %v683 = vpow.pop %v682
        %v684 = vmul.f32 %v639, 1.442695
        %v685 = vpow.pop %v684
        %v686 = vmul.f32 %v640, 1.442695
        %v687 = vpow.pop %v686
        %v688 = vmul.f32 %v641, 1.442695
        %v689 = vpow.pop %v688
        %v690 = vadd.f32 %v643, 1.0
        %v691 = vadd.f32 %v645, 1.0
        %v692 = vadd.f32 %v647, 1.0
        %v693 = vadd.f32 %v649, 1.0
        %v694 = vadd.f32 %v651, 1.0
        %v695 = vadd.f32 %v653, 1.0
        %v696 = vadd.f32 %v655, 1.0
        %v697 = vadd.f32 %v657, 1.0
        %v698 = vadd.f32 %v659, 1.0
        %v699 = vadd.f32 %v661, 1.0
        %v700 = vadd.f32 %v663, 1.0
        %v701 = vadd.f32 %v665, 1.0
        %v702 = vadd.f32 %v667, 1.0
        %v703 = vadd.f32 %v669, 1.0
        %v704 = vadd.f32 %v671, 1.0
        %v705 = vadd.f32 %v673, 1.0
        %v706 = vadd.f32 %v675, 1.0
        %v707 = vadd.f32 %v677, 1.0
        %v708 = vadd.f32 %v679, 1.0
        %v709 = vadd.f32 %v681, 1.0
        %v710 = vadd.f32 %v683, 1.0
        %v711 = vadd.f32 %v685, 1.0
        %v712 = vadd.f32 %v687, 1.0
        %v713 = vadd.f32 %v689, 1.0
        %v714 = vrcp.pop %v690
        %v715 = vmul.f32 1.0, %v714
        %v716 = vrcp.pop %v691
        %v717 = vmul.f32 1.0, %v716
        %v718 = vrcp.pop %v692
        %v719 = vmul.f32 1.0, %v718
        %v720 = vrcp.pop %v693
        %v721 = vmul.f32 1.0, %v720
        %v722 = vrcp.pop %v694
        %v723 = vmul.f32 1.0, %v722
        %v724 = vrcp.pop %v695
        %v725 = vmul.f32 1.0, %v724
        %v726 = vrcp.pop %v696
        %v727 = vmul.f32 1.0, %v726
        %v728 = vrcp.pop %v697
        %v729 = vmul.f32 1.0, %v728
        %v730 = vrcp.pop %v698
        %v731 = vmul.f32 1.0, %v730
        %v732 = vrcp.pop %v699
        %v733 = vmul.f32 1.0, %v732
        %v734 = vrcp.pop %v700
        %v735 = vmul.f32 1.0, %v734
        %v736 = vrcp.pop %v701
        %v737 = vmul.f32 1.0, %v736
        %v738 = vrcp.pop %v702
        %v739 = vmul.f32 1.0, %v738
        %v740 = vrcp.pop %v703
        %v741 = vmul.f32 1.0, %v740
        %v742 = vrcp.pop %v704
        %v743 = vmul.f32 1.0, %v742
        %v744 = vrcp.pop %v705
        %v745 = vmul.f32 1.0, %v744
        %v746 = vrcp.pop %v706
        %v747 = vmul.f32 1.0, %v746
        %v748 = vrcp.pop %v707
        %v749 = vmul.f32 1.0, %v748
        %v750 = vrcp.pop %v708
        %v751 = vmul.f32 1.0, %v750
        %v752 = vrcp.pop %v709
        %v753 = vmul.f32 1.0, %v752
        %v754 = vrcp.pop %v710
        %v755 = vmul.f32 1.0, %v754
        %v756 = vrcp.pop %v711
        %v757 = vmul.f32 1.0, %v756
        %v758 = vrcp.pop %v712
        %v759 = vmul.f32 1.0, %v758
        %v760 = vrcp.pop %v713
        %v761 = vmul.f32 1.0, %v760
        %v762 = vmul.f32 %v594, %v715
        %v763 = vmul.f32 %v595, %v717
        %v764 = vmul.f32 %v596, %v719
        %v765 = vmul.f32 %v597, %v721
        %v766 = vmul.f32 %v598, %v723
        %v767 = vmul.f32 %v599, %v725
        %v768 = vmul.f32 %v600, %v727
        %v769 = vmul.f32 %v601, %v729
        %v770 = vmul.f32 %v602, %v731
        %v771 = vmul.f32 %v603, %v733
        %v772 = vmul.f32 %v604, %v735
        %v773 = vmul.f32 %v605, %v737
        %v774 = vmul.f32 %v606, %v739
        %v775 = vmul.f32 %v607, %v741
        %v776 = vmul.f32 %v608, %v743
        %v777 = vmul.f32 %v609, %v745
        %v778 = vmul.f32 %v610, %v747
        %v779 = vmul.f32 %v611, %v749
        %v780 = vmul.f32 %v612, %v751
        %v781 = vmul.f32 %v613, %v753
        %v782 = vmul.f32 %v614, %v755
        %v783 = vmul.f32 %v615, %v757
        %v784 = vmul.f32 %v616, %v759
        %v785 = vmul.f32 %v617, %v761
        %v786 = vpack.c.bf16 %v763, %v762
        %v787 = vpack.c.bf16 %v765, %v764
        %v788 = vpack.c.bf16 %v767, %v766
        %v789 = vpack.c.bf16 %v769, %v768
        %v790 = vpack.c.bf16 %v771, %v770
        %v791 = vpack.c.bf16 %v773, %v772
        %v792 = vpack.c.bf16 %v775, %v774
        %v793 = vpack.c.bf16 %v777, %v776
        %v794 = vpack.c.bf16 %v779, %v778
        %v795 = vpack.c.bf16 %v781, %v780
        %v796 = vpack.c.bf16 %v783, %v782
        %v797 = vpack.c.bf16 %v785, %v784
        %v798 = vld [vmem:[#allocation13] sm:$0xf]
        %v799 = vld [vmem:[#allocation13 + $0x4] sm:$0xf]
        %v800 = vld [vmem:[#allocation14] sm:$0x1]
        %v802 = vlaneseq
        %v803 = vshrl.u32 %v802, 7
        %v804 = vsub.s32 0, %v803
        %v805 = vrot.slane %v800, %v804
        %v809 = vunpack.c.l.b16 %v798
        %v810 = vunpack.c.l.b16 %v799
        %v811 = vpack.c.b16 %v810, %v809
        %vm813 = vcmask 130048
        %v815 = vsel %vm813, %v786, 0
        %v818 = vsel %vm813, %v787, 0
        %v821 = vsel %vm813, %v788, 0
        %v824 = vsel %vm813, %v789, 0
        %v827 = vsel %vm813, %v790, 0
        %v830 = vsel %vm813, %v791, 0
        %v833 = vsel %vm813, %v792, 0
        %v836 = vsel %vm813, %v793, 0
        %v839 = vsel %vm813, %v794, 0
        %v842 = vsel %vm813, %v795, 0
        %v845 = vsel %vm813, %v796, 0
        %v848 = vsel %vm813, %v797, 0
        %850 = vmatprep.subr.bf16.mxu0 0
        %851 = vmatpush1.bf16.msra.mxu0 0
        %852 = vmatprep.subr.bf16.mxu0 0
        %853 = vmatpush1.bf16.msra.mxu0 0
        %854 = vmatprep.subr.bf16.mxu0 0
        %855 = vmatpush1.bf16.msra.mxu0 0
        %856 = vmatprep.subr.bf16.mxu0 0
        %857 = vmatpush1.bf16.msra.mxu0 0
        %858 = vmatprep.subr.bf16.mxu0 0
        %859 = vmatpush1.bf16.msra.mxu0 0
        %860 = vmatprep.subr.bf16.mxu0 0
        %861 = vmatpush1.bf16.msra.mxu0 0
        %862 = vmatprep.subr.bf16.mxu0 0
        %863 = vmatpush1.bf16.msra.mxu0 0
        %864 = vmatprep.subr.bf16.mxu0 0
        %865 = vmatpush1.bf16.msra.mxu0 %v811
        %866 = vmatprep.subr.bf16.mxu0 0
        %867 = vmatpush2.bf16.msra.mxu0 0
        %868 = vmatprep.subr.bf16.mxu0 0
        %869 = vmatpush2.bf16.msra.mxu0 0
        %870 = vmatprep.subr.bf16.mxu0 0
        %871 = vmatpush2.bf16.msra.mxu0 0
        %872 = vmatprep.subr.bf16.mxu0 0
        %873 = vmatpush2.bf16.msra.mxu0 0
        %874 = vmatprep.subr.bf16.mxu0 0
        %875 = vmatpush2.bf16.msra.mxu0 0
        %876 = vmatprep.subr.bf16.mxu0 0
        %877 = vmatpush2.bf16.msra.mxu0 0
        %878 = vmatprep.subr.bf16.mxu0 0
        %879 = vmatpush2.bf16.msra.mxu0 0
        %880 = vmatprep.subr.bf16.mxu0 0
        %881 = vmatpush2.bf16.msra.mxu0 0
        %882 = vmatprep.mubr.bf16.mxu0 0
        %883 = vmatmul.mubr.bf16.gmra.mxu0 %v815
        %v884 = vpop.f32.mrf.mxu0
        %v885 = vadd.f32 %v805, %v884
        %v886 = vpop.f32.mrf.mxu0
        %v887 = vpop.f32.mrf.mxu0
        %v888 = vadd.f32 %v805, %v887
        %v889 = vpop.f32.mrf.mxu0
        %890 = vmatprep.mubr.bf16.mxu0 0
        %891 = vmatmul.mubr.bf16.gmra.mxu0 %v818
        %v892 = vpop.f32.mrf.mxu0
        %v893 = vadd.f32 %v805, %v892
        %v894 = vpop.f32.mrf.mxu0
        %v895 = vpop.f32.mrf.mxu0
        %v896 = vadd.f32 %v805, %v895
        %v897 = vpop.f32.mrf.mxu0
        %898 = vmatprep.mubr.bf16.mxu0 0
        %899 = vmatmul.mubr.bf16.gmra.mxu0 %v821
        %v900 = vpop.f32.mrf.mxu0
        %v901 = vadd.f32 %v805, %v900
        %v902 = vpop.f32.mrf.mxu0
        %v903 = vpop.f32.mrf.mxu0
        %v904 = vadd.f32 %v805, %v903
        %v905 = vpop.f32.mrf.mxu0
        %906 = vmatprep.mubr.bf16.mxu0 0
        %907 = vmatmul.mubr.bf16.gmra.mxu0 %v824
        %v908 = vpop.f32.mrf.mxu0
        %v909 = vadd.f32 %v805, %v908
        %v910 = vpop.f32.mrf.mxu0
        %v911 = vpop.f32.mrf.mxu0
        %v912 = vadd.f32 %v805, %v911
        %v913 = vpop.f32.mrf.mxu0
        %914 = vmatprep.mubr.bf16.mxu0 0
        %915 = vmatmul.mubr.bf16.gmra.mxu0 %v827
        %v916 = vpop.f32.mrf.mxu0
        %v917 = vadd.f32 %v805, %v916
        %v918 = vpop.f32.mrf.mxu0
        %v919 = vpop.f32.mrf.mxu0
        %v920 = vadd.f32 %v805, %v919
        %v921 = vpop.f32.mrf.mxu0
        %922 = vmatprep.mubr.bf16.mxu0 0
        %923 = vmatmul.mubr.bf16.gmra.mxu0 %v830
        %v924 = vpop.f32.mrf.mxu0
        %v925 = vadd.f32 %v805, %v924
        %v926 = vpop.f32.mrf.mxu0
        %v927 = vpop.f32.mrf.mxu0
        %v928 = vadd.f32 %v805, %v927
        %v929 = vpop.f32.mrf.mxu0
        %930 = vmatprep.mubr.bf16.mxu0 0
        %931 = vmatmul.mubr.bf16.gmra.mxu0 %v833
        %v932 = vpop.f32.mrf.mxu0
        %v933 = vadd.f32 %v805, %v932
        %v934 = vpop.f32.mrf.mxu0
        %v935 = vpop.f32.mrf.mxu0
        %v936 = vadd.f32 %v805, %v935
        %v937 = vpop.f32.mrf.mxu0
        %938 = vmatprep.mubr.bf16.mxu0 0
        %939 = vmatmul.mubr.bf16.gmra.mxu0 %v836
        %v940 = vpop.f32.mrf.mxu0
        %v941 = vadd.f32 %v805, %v940
        %v942 = vpop.f32.mrf.mxu0
        %v943 = vpop.f32.mrf.mxu0
        %v944 = vadd.f32 %v805, %v943
        %v945 = vpop.f32.mrf.mxu0
        %946 = vmatprep.mubr.bf16.mxu0 0
        %947 = vmatmul.mubr.bf16.gmra.mxu0 %v839
        %v948 = vpop.f32.mrf.mxu0
        %v949 = vadd.f32 %v805, %v948
        %v950 = vpop.f32.mrf.mxu0
        %v951 = vpop.f32.mrf.mxu0
        %v952 = vadd.f32 %v805, %v951
        %v953 = vpop.f32.mrf.mxu0
        %954 = vmatprep.mubr.bf16.mxu0 0
        %955 = vmatmul.mubr.bf16.gmra.mxu0 %v842
        %v956 = vpop.f32.mrf.mxu0
        %v957 = vadd.f32 %v805, %v956
        %v958 = vpop.f32.mrf.mxu0
        %v959 = vpop.f32.mrf.mxu0
        %v960 = vadd.f32 %v805, %v959
        %v961 = vpop.f32.mrf.mxu0
        %962 = vmatprep.mubr.bf16.mxu0 0
        %963 = vmatmul.mubr.bf16.gmra.mxu0 %v845
        %v964 = vpop.f32.mrf.mxu0
        %v965 = vadd.f32 %v805, %v964
        %v966 = vpop.f32.mrf.mxu0
        %v967 = vpop.f32.mrf.mxu0
        %v968 = vadd.f32 %v805, %v967
        %v969 = vpop.f32.mrf.mxu0
        %970 = vmatprep.mubr.bf16.mxu0 0
        %971 = vmatmul.mubr.bf16.gmra.mxu0 %v848
        %v972 = vpop.f32.mrf.mxu0
        %v973 = vadd.f32 %v805, %v972
        %v974 = vpop.f32.mrf.mxu0
        %v975 = vpop.f32.mrf.mxu0
        %v976 = vadd.f32 %v805, %v975
        %v977 = vpop.f32.mrf.mxu0
        %978 = vdwg.mxu0
        %v979 = vld [vmem:[#allocation2] sm:$0xf]
        %v980 = vld [vmem:[#allocation2 + $0x4] sm:$0xf]
        %v981 = vld [vmem:[#allocation2 + $0x8] sm:$0xf]
        %v982 = vld [vmem:[#allocation2 + $0xc] sm:$0xf]
        %v983 = vld [vmem:[#allocation2 + $0x10] sm:$0xf]
        %v984 = vld [vmem:[#allocation2 + $0x14] sm:$0xf]
        %v985 = vld [vmem:[#allocation2 + $0x18] sm:$0xf]
        %v986 = vld [vmem:[#allocation2 + $0x1c] sm:$0xf]
        %v987 = vld [vmem:[#allocation2 + $0x20] sm:$0xf]
        %v988 = vld [vmem:[#allocation2 + $0x24] sm:$0xf]
        %v989 = vld [vmem:[#allocation2 + $0x28] sm:$0xf]
        %v990 = vld [vmem:[#allocation2 + $0x2c] sm:$0xf]
        %v991 = vld [vmem:[#allocation2 + $0x30] sm:$0xf]
        %v992 = vld [vmem:[#allocation2 + $0x34] sm:$0xf]
        %v993 = vld [vmem:[#allocation2 + $0x38] sm:$0xf]
        %v994 = vld [vmem:[#allocation2 + $0x3c] sm:$0xf]
        %v1011 = vunpack.c.l.b16 %v979
        %v1012 = vunpack.c.l.b16 %v980
        %v1013 = vunpack.c.l.b16 %v981
        %v1014 = vunpack.c.l.b16 %v982
        %v1015 = vunpack.c.l.b16 %v983
        %v1016 = vunpack.c.l.b16 %v984
        %v1017 = vunpack.c.l.b16 %v985
        %v1018 = vunpack.c.l.b16 %v986
        %v1019 = vunpack.c.l.b16 %v987
        %v1020 = vunpack.c.l.b16 %v988
        %v1021 = vunpack.c.l.b16 %v989
        %v1022 = vunpack.c.l.b16 %v990
        %v1023 = vunpack.c.l.b16 %v991
        %v1024 = vunpack.c.l.b16 %v992
        %v1025 = vunpack.c.l.b16 %v993
        %v1026 = vunpack.c.l.b16 %v994
        %v1027 = vpack.c.b16 %v1012, %v1011
        %v1028 = vpack.c.b16 %v1014, %v1013
        %v1029 = vpack.c.b16 %v1016, %v1015
        %v1030 = vpack.c.b16 %v1018, %v1017
        %v1031 = vpack.c.b16 %v1020, %v1019
        %v1032 = vpack.c.b16 %v1022, %v1021
        %v1033 = vpack.c.b16 %v1024, %v1023
        %v1034 = vpack.c.b16 %v1026, %v1025
        %1043 = vmatprep.subr.bf16.mxu0 0
        %1044 = vmatpush1.bf16.msra.mxu0 %v1034
        %1045 = vmatprep.subr.bf16.mxu0 0
        %1046 = vmatpush1.bf16.msra.mxu0 %v1033
        %1047 = vmatprep.subr.bf16.mxu0 0
        %1048 = vmatpush1.bf16.msra.mxu0 %v1032
        %1049 = vmatprep.subr.bf16.mxu0 0
        %1050 = vmatpush1.bf16.msra.mxu0 %v1031
        %1051 = vmatprep.subr.bf16.mxu0 0
        %1052 = vmatpush1.bf16.msra.mxu0 %v1030
        %1053 = vmatprep.subr.bf16.mxu0 0
        %1054 = vmatpush1.bf16.msra.mxu0 %v1029
        %1055 = vmatprep.subr.bf16.mxu0 0
        %1056 = vmatpush1.bf16.msra.mxu0 %v1028
        %1057 = vmatprep.subr.bf16.mxu0 0
        %1058 = vmatpush1.bf16.msra.mxu0 %v1027
        %1059 = vmatprep.subr.bf16.mxu0 0
        %1060 = vmatpush2.bf16.msra.mxu0 0
        %1061 = vmatprep.subr.bf16.mxu0 0
        %1062 = vmatpush2.bf16.msra.mxu0 0
        %1063 = vmatprep.subr.bf16.mxu0 0
        %1064 = vmatpush2.bf16.msra.mxu0 0
        %1065 = vmatprep.subr.bf16.mxu0 0
        %1066 = vmatpush2.bf16.msra.mxu0 0
        %1067 = vmatprep.subr.bf16.mxu0 0
        %1068 = vmatpush2.bf16.msra.mxu0 0
        %1069 = vmatprep.subr.bf16.mxu0 0
        %1070 = vmatpush2.bf16.msra.mxu0 0
        %1071 = vmatprep.subr.bf16.mxu0 0
        %1072 = vmatpush2.bf16.msra.mxu0 0
        %1073 = vmatprep.subr.bf16.mxu0 0
        %1074 = vmatpush2.bf16.msra.mxu0 0
        %1075 = vmatprep.mubr.bf16.mxu0 0
        %1076 = vmatmul.mubr.bf16.gmra.mxu0 %v582
        %v1077 = vpop.f32.mrf.mxu0
        %v1078 = vadd.f32 0.0, %v1077
        %v1079 = vpop.f32.mrf.mxu0
        %v1080 = vpop.f32.mrf.mxu0
        %v1081 = vadd.f32 0.0, %v1080
        %v1082 = vpop.f32.mrf.mxu0
        %1083 = vmatprep.mubr.bf16.mxu0 0
        %1084 = vmatmul.mubr.bf16.gmra.mxu0 %v583
        %v1085 = vpop.f32.mrf.mxu0
        %v1086 = vadd.f32 0.0, %v1085
        %v1087 = vpop.f32.mrf.mxu0
        %v1088 = vpop.f32.mrf.mxu0
        %v1089 = vadd.f32 0.0, %v1088
        %v1090 = vpop.f32.mrf.mxu0
        %1091 = vmatprep.mubr.bf16.mxu0 0
        %1092 = vmatmul.mubr.bf16.gmra.mxu0 %v584
        %v1093 = vpop.f32.mrf.mxu0
        %v1094 = vadd.f32 0.0, %v1093
        %v1095 = vpop.f32.mrf.mxu0
        %v1096 = vpop.f32.mrf.mxu0
        %v1097 = vadd.f32 0.0, %v1096
        %v1098 = vpop.f32.mrf.mxu0
        %1099 = vmatprep.mubr.bf16.mxu0 0
        %1100 = vmatmul.mubr.bf16.gmra.mxu0 %v585
        %v1101 = vpop.f32.mrf.mxu0
        %v1102 = vadd.f32 0.0, %v1101
        %v1103 = vpop.f32.mrf.mxu0
        %v1104 = vpop.f32.mrf.mxu0
        %v1105 = vadd.f32 0.0, %v1104
        %v1106 = vpop.f32.mrf.mxu0
        %1107 = vmatprep.mubr.bf16.mxu0 0
        %1108 = vmatmul.mubr.bf16.gmra.mxu0 %v586
        %v1109 = vpop.f32.mrf.mxu0
        %v1110 = vadd.f32 0.0, %v1109
        %v1111 = vpop.f32.mrf.mxu0
        %v1112 = vpop.f32.mrf.mxu0
        %v1113 = vadd.f32 0.0, %v1112
        %v1114 = vpop.f32.mrf.mxu0
        %1115 = vmatprep.mubr.bf16.mxu0 0
        %1116 = vmatmul.mubr.bf16.gmra.mxu0 %v587
        %v1117 = vpop.f32.mrf.mxu0
        %v1118 = vadd.f32 0.0, %v1117
        %v1119 = vpop.f32.mrf.mxu0
        %v1120 = vpop.f32.mrf.mxu0
        %v1121 = vadd.f32 0.0, %v1120
        %v1122 = vpop.f32.mrf.mxu0
        %1123 = vmatprep.mubr.bf16.mxu0 0
        %1124 = vmatmul.mubr.bf16.gmra.mxu0 %v588
        %v1125 = vpop.f32.mrf.mxu0
        %v1126 = vadd.f32 0.0, %v1125
        %v1127 = vpop.f32.mrf.mxu0
        %v1128 = vpop.f32.mrf.mxu0
        %v1129 = vadd.f32 0.0, %v1128
        %v1130 = vpop.f32.mrf.mxu0
        %1131 = vmatprep.mubr.bf16.mxu0 0
        %1132 = vmatmul.mubr.bf16.gmra.mxu0 %v589
        %v1133 = vpop.f32.mrf.mxu0
        %v1134 = vadd.f32 0.0, %v1133
        %v1135 = vpop.f32.mrf.mxu0
        %v1136 = vpop.f32.mrf.mxu0
        %v1137 = vadd.f32 0.0, %v1136
        %v1138 = vpop.f32.mrf.mxu0
        %1139 = vmatprep.mubr.bf16.mxu0 0
        %1140 = vmatmul.mubr.bf16.gmra.mxu0 %v590
        %v1141 = vpop.f32.mrf.mxu0
        %v1142 = vadd.f32 0.0, %v1141
        %v1143 = vpop.f32.mrf.mxu0
        %v1144 = vpop.f32.mrf.mxu0
        %v1145 = vadd.f32 0.0, %v1144
        %v1146 = vpop.f32.mrf.mxu0
        %1147 = vmatprep.mubr.bf16.mxu0 0
        %1148 = vmatmul.mubr.bf16.gmra.mxu0 %v591
        %v1149 = vpop.f32.mrf.mxu0
        %v1150 = vadd.f32 0.0, %v1149
        %v1151 = vpop.f32.mrf.mxu0
        %v1152 = vpop.f32.mrf.mxu0
        %v1153 = vadd.f32 0.0, %v1152
        %v1154 = vpop.f32.mrf.mxu0
        %1155 = vmatprep.mubr.bf16.mxu0 0
        %1156 = vmatmul.mubr.bf16.gmra.mxu0 %v592
        %v1157 = vpop.f32.mrf.mxu0
        %v1158 = vadd.f32 0.0, %v1157
        %v1159 = vpop.f32.mrf.mxu0
        %v1160 = vpop.f32.mrf.mxu0
        %v1161 = vadd.f32 0.0, %v1160
        %v1162 = vpop.f32.mrf.mxu0
        %1163 = vmatprep.mubr.bf16.mxu0 0
        %1164 = vmatmul.mubr.bf16.gmra.mxu0 %v593
        %v1165 = vpop.f32.mrf.mxu0
        %v1166 = vadd.f32 0.0, %v1165
        %v1167 = vpop.f32.mrf.mxu0
        %v1168 = vpop.f32.mrf.mxu0
        %v1169 = vadd.f32 0.0, %v1168
        %v1170 = vpop.f32.mrf.mxu0
        %1171 = vdwg.mxu0
        %v1172 = vld [vmem:[#allocation5] sm:$0x1]
        %v1174 = vlaneseq
        %v1175 = vshrl.u32 %v1174, 7
        %v1176 = vsub.s32 0, %v1175
        %v1177 = vrot.slane %v1172, %v1176
        %v1179 = vmul.f32 %v1078, %v1177
        %v1180 = vmul.f32 %v1081, %v1177
        %v1181 = vmul.f32 %v1086, %v1177
        %v1182 = vmul.f32 %v1089, %v1177
        %v1183 = vmul.f32 %v1094, %v1177
        %v1184 = vmul.f32 %v1097, %v1177
        %v1185 = vmul.f32 %v1102, %v1177
        %v1186 = vmul.f32 %v1105, %v1177
        %v1187 = vmul.f32 %v1110, %v1177
        %v1188 = vmul.f32 %v1113, %v1177
        %v1189 = vmul.f32 %v1118, %v1177
        %v1190 = vmul.f32 %v1121, %v1177
        %v1191 = vmul.f32 %v1126, %v1177
        %v1192 = vmul.f32 %v1129, %v1177
        %v1193 = vmul.f32 %v1134, %v1177
        %v1194 = vmul.f32 %v1137, %v1177
        %v1195 = vmul.f32 %v1142, %v1177
        %v1196 = vmul.f32 %v1145, %v1177
        %v1197 = vmul.f32 %v1150, %v1177
        %v1198 = vmul.f32 %v1153, %v1177
        %v1199 = vmul.f32 %v1158, %v1177
        %v1200 = vmul.f32 %v1161, %v1177
        %v1201 = vmul.f32 %v1166, %v1177
        %v1202 = vmul.f32 %v1169, %v1177
        %v1203 = vld [vmem:[#allocation7] sm:$0x1]
        %v1205 = vlaneseq
        %v1206 = vshrl.u32 %v1205, 7
        %v1207 = vsub.s32 0, %v1206
        %v1208 = vrot.slane %v1203, %v1207
        %v1210 = vadd.f32 %v1179, %v1208
        %v1211 = vadd.f32 %v1180, %v1208
        %v1212 = vadd.f32 %v1181, %v1208
        %v1213 = vadd.f32 %v1182, %v1208
        %v1214 = vadd.f32 %v1183, %v1208
        %v1215 = vadd.f32 %v1184, %v1208
        %v1216 = vadd.f32 %v1185, %v1208
        %v1217 = vadd.f32 %v1186, %v1208
        %v1218 = vadd.f32 %v1187, %v1208
        %v1219 = vadd.f32 %v1188, %v1208
        %v1220 = vadd.f32 %v1189, %v1208
        %v1221 = vadd.f32 %v1190, %v1208
        %v1222 = vadd.f32 %v1191, %v1208
        %v1223 = vadd.f32 %v1192, %v1208
        %v1224 = vadd.f32 %v1193, %v1208
        %v1225 = vadd.f32 %v1194, %v1208
        %v1226 = vadd.f32 %v1195, %v1208
        %v1227 = vadd.f32 %v1196, %v1208
        %v1228 = vadd.f32 %v1197, %v1208
        %v1229 = vadd.f32 %v1198, %v1208
        %v1230 = vadd.f32 %v1199, %v1208
        %v1231 = vadd.f32 %v1200, %v1208
        %v1232 = vadd.f32 %v1201, %v1208
        %v1233 = vadd.f32 %v1202, %v1208
        %v1234 = vpack.c.bf16 %v1211, %v1210
        %v1235 = vpack.c.bf16 %v1213, %v1212
        %v1236 = vpack.c.bf16 %v1215, %v1214
        %v1237 = vpack.c.bf16 %v1217, %v1216
        %v1238 = vpack.c.bf16 %v1219, %v1218
        %v1239 = vpack.c.bf16 %v1221, %v1220
        %v1240 = vpack.c.bf16 %v1223, %v1222
        %v1241 = vpack.c.bf16 %v1225, %v1224
        %v1242 = vpack.c.bf16 %v1227, %v1226
        %v1243 = vpack.c.bf16 %v1229, %v1228
        %v1244 = vpack.c.bf16 %v1231, %v1230
        %v1245 = vpack.c.bf16 %v1233, %v1232
        %v1246 = vxor.u32 %v1234, 2147516416
        %v1247 = vxor.u32 %v1235, 2147516416
        %v1248 = vxor.u32 %v1236, 2147516416
        %v1249 = vxor.u32 %v1237, 2147516416
        %v1250 = vxor.u32 %v1238, 2147516416
        %v1251 = vxor.u32 %v1239, 2147516416
        %v1252 = vxor.u32 %v1240, 2147516416
        %v1253 = vxor.u32 %v1241, 2147516416
        %v1254 = vxor.u32 %v1242, 2147516416
        %v1255 = vxor.u32 %v1243, 2147516416
        %v1256 = vxor.u32 %v1244, 2147516416
        %v1257 = vxor.u32 %v1245, 2147516416
        %v1259 = vmul.bf16 %v1246, 1069105081
        %v1260 = vpow.bf16.pop %v1259
        %v1262 = vmul.bf16 %v1247, 1069105081
        %v1263 = vpow.bf16.pop %v1262
        %v1265 = vmul.bf16 %v1248, 1069105081
        %v1266 = vpow.bf16.pop %v1265
        %v1268 = vmul.bf16 %v1249, 1069105081
        %v1269 = vpow.bf16.pop %v1268
        %v1271 = vmul.bf16 %v1250, 1069105081
        %v1272 = vpow.bf16.pop %v1271
        %v1274 = vmul.bf16 %v1251, 1069105081
        %v1275 = vpow.bf16.pop %v1274
        %v1277 = vmul.bf16 %v1252, 1069105081
        %v1278 = vpow.bf16.pop %v1277
        %v1280 = vmul.bf16 %v1253, 1069105081
        %v1281 = vpow.bf16.pop %v1280
        %v1283 = vmul.bf16 %v1254, 1069105081
        %v1284 = vpow.bf16.pop %v1283
        %v1286 = vmul.bf16 %v1255, 1069105081
        %v1287 = vpow.bf16.pop %v1286
        %v1289 = vmul.bf16 %v1256, 1069105081
        %v1290 = vpow.bf16.pop %v1289
        %v1292 = vmul.bf16 %v1257, 1069105081
        %v1293 = vpow.bf16.pop %v1292
        %v1294 = vadd.bf16 %v1260, 1065369472
        %v1295 = vadd.bf16 %v1263, 1065369472
        %v1296 = vadd.bf16 %v1266, 1065369472
        %v1297 = vadd.bf16 %v1269, 1065369472
        %v1298 = vadd.bf16 %v1272, 1065369472
        %v1299 = vadd.bf16 %v1275, 1065369472
        %v1300 = vadd.bf16 %v1278, 1065369472
        %v1301 = vadd.bf16 %v1281, 1065369472
        %v1302 = vadd.bf16 %v1284, 1065369472
        %v1303 = vadd.bf16 %v1287, 1065369472
        %v1304 = vadd.bf16 %v1290, 1065369472
        %v1305 = vadd.bf16 %v1293, 1065369472
        %v1306 = vrcp.bf16.pop %v1294
        %v1307 = vmul.bf16 1065369472, %v1306
        %v1308 = vrcp.bf16.pop %v1295
        %v1309 = vmul.bf16 1065369472, %v1308
        %v1310 = vrcp.bf16.pop %v1296
        %v1311 = vmul.bf16 1065369472, %v1310
        %v1312 = vrcp.bf16.pop %v1297
        %v1313 = vmul.bf16 1065369472, %v1312
        %v1314 = vrcp.bf16.pop %v1298
        %v1315 = vmul.bf16 1065369472, %v1314
        %v1316 = vrcp.bf16.pop %v1299
        %v1317 = vmul.bf16 1065369472, %v1316
        %v1318 = vrcp.bf16.pop %v1300
        %v1319 = vmul.bf16 1065369472, %v1318
        %v1320 = vrcp.bf16.pop %v1301
        %v1321 = vmul.bf16 1065369472, %v1320
        %v1322 = vrcp.bf16.pop %v1302
        %v1323 = vmul.bf16 1065369472, %v1322
        %v1324 = vrcp.bf16.pop %v1303
        %v1325 = vmul.bf16 1065369472, %v1324
        %v1326 = vrcp.bf16.pop %v1304
        %v1327 = vmul.bf16 1065369472, %v1326
        %v1328 = vrcp.bf16.pop %v1305
        %v1329 = vmul.bf16 1065369472, %v1328
        %v1330 = vmul.bf16 %v1234, %v1307
        %v1331 = vmul.bf16 %v1235, %v1309
        %v1332 = vmul.bf16 %v1236, %v1311
        %v1333 = vmul.bf16 %v1237, %v1313
        %v1334 = vmul.bf16 %v1238, %v1315
        %v1335 = vmul.bf16 %v1239, %v1317
        %v1336 = vmul.bf16 %v1240, %v1319
        %v1337 = vmul.bf16 %v1241, %v1321
        %v1338 = vmul.bf16 %v1242, %v1323
        %v1339 = vmul.bf16 %v1243, %v1325
        %v1340 = vmul.bf16 %v1244, %v1327
        %v1341 = vmul.bf16 %v1245, %v1329
        %v1342 = vld [vmem:[#allocation8] sm:$0xf]
        %v1343 = vld [vmem:[#allocation8 + $0x4] sm:$0xf]
        %v1344 = vld [vmem:[#allocation8 + $0x8] sm:$0xf]
        %v1345 = vld [vmem:[#allocation8 + $0xc] sm:$0xf]
        %v1346 = vld [vmem:[#allocation8 + $0x10] sm:$0xf]
        %v1347 = vld [vmem:[#allocation8 + $0x14] sm:$0xf]
        %v1348 = vld [vmem:[#allocation8 + $0x18] sm:$0xf]
        %v1349 = vld [vmem:[#allocation8 + $0x1c] sm:$0xf]
        %v1350 = vld [vmem:[#allocation8 + $0x20] sm:$0xf]
        %v1351 = vld [vmem:[#allocation8 + $0x24] sm:$0xf]
        %v1352 = vld [vmem:[#allocation8 + $0x28] sm:$0xf]
        %v1353 = vld [vmem:[#allocation8 + $0x2c] sm:$0xf]
        %v1354 = vld [vmem:[#allocation8 + $0x30] sm:$0xf]
        %v1355 = vld [vmem:[#allocation8 + $0x34] sm:$0xf]
        %v1356 = vld [vmem:[#allocation8 + $0x38] sm:$0xf]
        %v1357 = vld [vmem:[#allocation8 + $0x3c] sm:$0xf]
        %v1374 = vunpack.c.l.b16 %v1342
        %v1375 = vunpack.c.l.b16 %v1343
        %v1376 = vunpack.c.l.b16 %v1344
        %v1377 = vunpack.c.l.b16 %v1345
        %v1378 = vunpack.c.l.b16 %v1346
        %v1379 = vunpack.c.l.b16 %v1347
        %v1380 = vunpack.c.l.b16 %v1348
        %v1381 = vunpack.c.l.b16 %v1349
        %v1382 = vunpack.c.l.b16 %v1350
        %v1383 = vunpack.c.l.b16 %v1351
        %v1384 = vunpack.c.l.b16 %v1352
        %v1385 = vunpack.c.l.b16 %v1353
        %v1386 = vunpack.c.l.b16 %v1354
        %v1387 = vunpack.c.l.b16 %v1355
        %v1388 = vunpack.c.l.b16 %v1356
        %v1389 = vunpack.c.l.b16 %v1357
        %v1390 = vpack.c.b16 %v1375, %v1374
        %v1391 = vpack.c.b16 %v1377, %v1376
        %v1392 = vpack.c.b16 %v1379, %v1378
        %v1393 = vpack.c.b16 %v1381, %v1380
        %v1394 = vpack.c.b16 %v1383, %v1382
        %v1395 = vpack.c.b16 %v1385, %v1384
        %v1396 = vpack.c.b16 %v1387, %v1386
        %v1397 = vpack.c.b16 %v1389, %v1388
        %1406 = vmatprep.subr.bf16.mxu0 0
        %1407 = vmatpush1.bf16.msra.mxu0 %v1397
        %1408 = vmatprep.subr.bf16.mxu0 0
        %1409 = vmatpush1.bf16.msra.mxu0 %v1396
        %1410 = vmatprep.subr.bf16.mxu0 0
        %1411 = vmatpush1.bf16.msra.mxu0 %v1395
        %1412 = vmatprep.subr.bf16.mxu0 0
        %1413 = vmatpush1.bf16.msra.mxu0 %v1394
        %1414 = vmatprep.subr.bf16.mxu0 0
        %1415 = vmatpush1.bf16.msra.mxu0 %v1393
        %1416 = vmatprep.subr.bf16.mxu0 0
        %1417 = vmatpush1.bf16.msra.mxu0 %v1392
        %1418 = vmatprep.subr.bf16.mxu0 0
        %1419 = vmatpush1.bf16.msra.mxu0 %v1391
        %1420 = vmatprep.subr.bf16.mxu0 0
        %1421 = vmatpush1.bf16.msra.mxu0 %v1390
        %1422 = vmatprep.subr.bf16.mxu0 0
        %1423 = vmatpush2.bf16.msra.mxu0 0
        %1424 = vmatprep.subr.bf16.mxu0 0
        %1425 = vmatpush2.bf16.msra.mxu0 0
        %1426 = vmatprep.subr.bf16.mxu0 0
        %1427 = vmatpush2.bf16.msra.mxu0 0
        %1428 = vmatprep.subr.bf16.mxu0 0
        %1429 = vmatpush2.bf16.msra.mxu0 0
        %1430 = vmatprep.subr.bf16.mxu0 0
        %1431 = vmatpush2.bf16.msra.mxu0 0
        %1432 = vmatprep.subr.bf16.mxu0 0
        %1433 = vmatpush2.bf16.msra.mxu0 0
        %1434 = vmatprep.subr.bf16.mxu0 0
        %1435 = vmatpush2.bf16.msra.mxu0 0
        %1436 = vmatprep.subr.bf16.mxu0 0
        %1437 = vmatpush2.bf16.msra.mxu0 0
        %1438 = vmatprep.mubr.bf16.mxu0 0
        %1439 = vmatmul.mubr.bf16.gmra.mxu0 %v1330
        %v1440 = vpop.f32.mrf.mxu0
        %v1441 = vadd.f32 0.0, %v1440
        %v1442 = vpop.f32.mrf.mxu0
        %v1443 = vpop.f32.mrf.mxu0
        %v1444 = vadd.f32 0.0, %v1443
        %v1445 = vpop.f32.mrf.mxu0
        %1446 = vmatprep.mubr.bf16.mxu0 0
        %1447 = vmatmul.mubr.bf16.gmra.mxu0 %v1331
        %v1448 = vpop.f32.mrf.mxu0
        %v1449 = vadd.f32 0.0, %v1448
        %v1450 = vpop.f32.mrf.mxu0
        %v1451 = vpop.f32.mrf.mxu0
        %v1452 = vadd.f32 0.0, %v1451
        %v1453 = vpop.f32.mrf.mxu0
        %1454 = vmatprep.mubr.bf16.mxu0 0
        %1455 = vmatmul.mubr.bf16.gmra.mxu0 %v1332
        %v1456 = vpop.f32.mrf.mxu0
        %v1457 = vadd.f32 0.0, %v1456
        %v1458 = vpop.f32.mrf.mxu0
        %v1459 = vpop.f32.mrf.mxu0
        %v1460 = vadd.f32 0.0, %v1459
        %v1461 = vpop.f32.mrf.mxu0
        %1462 = vmatprep.mubr.bf16.mxu0 0
        %1463 = vmatmul.mubr.bf16.gmra.mxu0 %v1333
        %v1464 = vpop.f32.mrf.mxu0
        %v1465 = vadd.f32 0.0, %v1464
        %v1466 = vpop.f32.mrf.mxu0
        %v1467 = vpop.f32.mrf.mxu0
        %v1468 = vadd.f32 0.0, %v1467
        %v1469 = vpop.f32.mrf.mxu0
        %1470 = vmatprep.mubr.bf16.mxu0 0
        %1471 = vmatmul.mubr.bf16.gmra.mxu0 %v1334
        %v1472 = vpop.f32.mrf.mxu0
        %v1473 = vadd.f32 0.0, %v1472
        %v1474 = vpop.f32.mrf.mxu0
        %v1475 = vpop.f32.mrf.mxu0
        %v1476 = vadd.f32 0.0, %v1475
        %v1477 = vpop.f32.mrf.mxu0
        %1478 = vmatprep.mubr.bf16.mxu0 0
        %1479 = vmatmul.mubr.bf16.gmra.mxu0 %v1335
        %v1480 = vpop.f32.mrf.mxu0
        %v1481 = vadd.f32 0.0, %v1480
        %v1482 = vpop.f32.mrf.mxu0
        %v1483 = vpop.f32.mrf.mxu0
        %v1484 = vadd.f32 0.0, %v1483
        %v1485 = vpop.f32.mrf.mxu0
        %1486 = vmatprep.mubr.bf16.mxu0 0
        %1487 = vmatmul.mubr.bf16.gmra.mxu0 %v1336
        %v1488 = vpop.f32.mrf.mxu0
        %v1489 = vadd.f32 0.0, %v1488
        %v1490 = vpop.f32.mrf.mxu0
        %v1491 = vpop.f32.mrf.mxu0
        %v1492 = vadd.f32 0.0, %v1491
        %v1493 = vpop.f32.mrf.mxu0
        %1494 = vmatprep.mubr.bf16.mxu0 0
        %1495 = vmatmul.mubr.bf16.gmra.mxu0 %v1337
        %v1496 = vpop.f32.mrf.mxu0
        %v1497 = vadd.f32 0.0, %v1496
        %v1498 = vpop.f32.mrf.mxu0
        %v1499 = vpop.f32.mrf.mxu0
        %v1500 = vadd.f32 0.0, %v1499
        %v1501 = vpop.f32.mrf.mxu0
        %1502 = vmatprep.mubr.bf16.mxu0 0
        %1503 = vmatmul.mubr.bf16.gmra.mxu0 %v1338
        %v1504 = vpop.f32.mrf.mxu0
        %v1505 = vadd.f32 0.0, %v1504
        %v1506 = vpop.f32.mrf.mxu0
        %v1507 = vpop.f32.mrf.mxu0
        %v1508 = vadd.f32 0.0, %v1507
        %v1509 = vpop.f32.mrf.mxu0
        %1510 = vmatprep.mubr.bf16.mxu0 0
        %1511 = vmatmul.mubr.bf16.gmra.mxu0 %v1339
        %v1512 = vpop.f32.mrf.mxu0
        %v1513 = vadd.f32 0.0, %v1512
        %v1514 = vpop.f32.mrf.mxu0
        %v1515 = vpop.f32.mrf.mxu0
        %v1516 = vadd.f32 0.0, %v1515
        %v1517 = vpop.f32.mrf.mxu0
        %1518 = vmatprep.mubr.bf16.mxu0 0
        %1519 = vmatmul.mubr.bf16.gmra.mxu0 %v1340
        %v1520 = vpop.f32.mrf.mxu0
        %v1521 = vadd.f32 0.0, %v1520
        %v1522 = vpop.f32.mrf.mxu0
        %v1523 = vpop.f32.mrf.mxu0
        %v1524 = vadd.f32 0.0, %v1523
        %v1525 = vpop.f32.mrf.mxu0
        %1526 = vmatprep.mubr.bf16.mxu0 0
        %1527 = vmatmul.mubr.bf16.gmra.mxu0 %v1341
        %v1528 = vpop.f32.mrf.mxu0
        %v1529 = vadd.f32 0.0, %v1528
        %v1530 = vpop.f32.mrf.mxu0
        %v1531 = vpop.f32.mrf.mxu0
        %v1532 = vadd.f32 0.0, %v1531
        %v1533 = vpop.f32.mrf.mxu0
        %1534 = vdwg.mxu0
        %v1535 = vld [vmem:[#allocation10] sm:$0x1]
        %v1537 = vlaneseq
        %v1538 = vshrl.u32 %v1537, 7
        %v1539 = vsub.s32 0, %v1538
        %v1540 = vrot.slane %v1535, %v1539
        %v1542 = vmul.f32 %v1441, %v1540
        %v1543 = vmul.f32 %v1444, %v1540
        %v1544 = vmul.f32 %v1449, %v1540
        %v1545 = vmul.f32 %v1452, %v1540
        %v1546 = vmul.f32 %v1457, %v1540
        %v1547 = vmul.f32 %v1460, %v1540
        %v1548 = vmul.f32 %v1465, %v1540
        %v1549 = vmul.f32 %v1468, %v1540
        %v1550 = vmul.f32 %v1473, %v1540
        %v1551 = vmul.f32 %v1476, %v1540
        %v1552 = vmul.f32 %v1481, %v1540
        %v1553 = vmul.f32 %v1484, %v1540
        %v1554 = vmul.f32 %v1489, %v1540
        %v1555 = vmul.f32 %v1492, %v1540
        %v1556 = vmul.f32 %v1497, %v1540
        %v1557 = vmul.f32 %v1500, %v1540
        %v1558 = vmul.f32 %v1505, %v1540
        %v1559 = vmul.f32 %v1508, %v1540
        %v1560 = vmul.f32 %v1513, %v1540
        %v1561 = vmul.f32 %v1516, %v1540
        %v1562 = vmul.f32 %v1521, %v1540
        %v1563 = vmul.f32 %v1524, %v1540
        %v1564 = vmul.f32 %v1529, %v1540
        %v1565 = vmul.f32 %v1532, %v1540
        %v1566 = vld [vmem:[#allocation11] sm:$0x1]
        %v1568 = vlaneseq
        %v1569 = vshrl.u32 %v1568, 7
        %v1570 = vsub.s32 0, %v1569
        %v1571 = vrot.slane %v1566, %v1570
        %v1573 = vadd.f32 %v1542, %v1571
        %v1574 = vadd.f32 %v1543, %v1571
        %v1575 = vadd.f32 %v1544, %v1571
        %v1576 = vadd.f32 %v1545, %v1571
        %v1577 = vadd.f32 %v1546, %v1571
        %v1578 = vadd.f32 %v1547, %v1571
        %v1579 = vadd.f32 %v1548, %v1571
        %v1580 = vadd.f32 %v1549, %v1571
        %v1581 = vadd.f32 %v1550, %v1571
        %v1582 = vadd.f32 %v1551, %v1571
        %v1583 = vadd.f32 %v1552, %v1571
        %v1584 = vadd.f32 %v1553, %v1571
        %v1585 = vadd.f32 %v1554, %v1571
        %v1586 = vadd.f32 %v1555, %v1571
        %v1587 = vadd.f32 %v1556, %v1571
        %v1588 = vadd.f32 %v1557, %v1571
        %v1589 = vadd.f32 %v1558, %v1571
        %v1590 = vadd.f32 %v1559, %v1571
        %v1591 = vadd.f32 %v1560, %v1571
        %v1592 = vadd.f32 %v1561, %v1571
        %v1593 = vadd.f32 %v1562, %v1571
        %v1594 = vadd.f32 %v1563, %v1571
        %v1595 = vadd.f32 %v1564, %v1571
        %v1596 = vadd.f32 %v1565, %v1571
        %v1597 = vpack.c.bf16 %v1574, %v1573
        %v1598 = vpack.c.bf16 %v1576, %v1575
        %v1599 = vpack.c.bf16 %v1578, %v1577
        %v1600 = vpack.c.bf16 %v1580, %v1579
        %v1601 = vpack.c.bf16 %v1582, %v1581
        %v1602 = vpack.c.bf16 %v1584, %v1583
        %v1603 = vpack.c.bf16 %v1586, %v1585
        %v1604 = vpack.c.bf16 %v1588, %v1587
        %v1605 = vpack.c.bf16 %v1590, %v1589
        %v1606 = vpack.c.bf16 %v1592, %v1591
        %v1607 = vpack.c.bf16 %v1594, %v1593
        %v1608 = vpack.c.bf16 %v1596, %v1595
        %v1609 = vxor.u32 %v1597, 2147516416
        %v1610 = vxor.u32 %v1598, 2147516416
        %v1611 = vxor.u32 %v1599, 2147516416
        %v1612 = vxor.u32 %v1600, 2147516416
        %v1613 = vxor.u32 %v1601, 2147516416
        %v1614 = vxor.u32 %v1602, 2147516416
        %v1615 = vxor.u32 %v1603, 2147516416
        %v1616 = vxor.u32 %v1604, 2147516416
        %v1617 = vxor.u32 %v1605, 2147516416
        %v1618 = vxor.u32 %v1606, 2147516416
        %v1619 = vxor.u32 %v1607, 2147516416
        %v1620 = vxor.u32 %v1608, 2147516416
        %v1622 = vmul.bf16 %v1609, 1069105081
        %v1623 = vpow.bf16.pop %v1622
        %v1625 = vmul.bf16 %v1610, 1069105081
        %v1626 = vpow.bf16.pop %v1625
        %v1628 = vmul.bf16 %v1611, 1069105081
        %v1629 = vpow.bf16.pop %v1628
        %v1631 = vmul.bf16 %v1612, 1069105081
        %v1632 = vpow.bf16.pop %v1631
        %v1634 = vmul.bf16 %v1613, 1069105081
        %v1635 = vpow.bf16.pop %v1634
        %v1637 = vmul.bf16 %v1614, 1069105081
        %v1638 = vpow.bf16.pop %v1637
        %v1640 = vmul.bf16 %v1615, 1069105081
        %v1641 = vpow.bf16.pop %v1640
        %v1643 = vmul.bf16 %v1616, 1069105081
        %v1644 = vpow.bf16.pop %v1643
        %v1646 = vmul.bf16 %v1617, 1069105081
        %v1647 = vpow.bf16.pop %v1646
        %v1649 = vmul.bf16 %v1618, 1069105081
        %v1650 = vpow.bf16.pop %v1649
        %v1652 = vmul.bf16 %v1619, 1069105081
        %v1653 = vpow.bf16.pop %v1652
        %v1655 = vmul.bf16 %v1620, 1069105081
        %v1656 = vpow.bf16.pop %v1655
        %v1657 = vadd.bf16 %v1623, 1065369472
        %v1658 = vadd.bf16 %v1626, 1065369472
        %v1659 = vadd.bf16 %v1629, 1065369472
        %v1660 = vadd.bf16 %v1632, 1065369472
        %v1661 = vadd.bf16 %v1635, 1065369472
        %v1662 = vadd.bf16 %v1638, 1065369472
        %v1663 = vadd.bf16 %v1641, 1065369472
        %v1664 = vadd.bf16 %v1644, 1065369472
        %v1665 = vadd.bf16 %v1647, 1065369472
        %v1666 = vadd.bf16 %v1650, 1065369472
        %v1667 = vadd.bf16 %v1653, 1065369472
        %v1668 = vadd.bf16 %v1656, 1065369472
        %v1669 = vrcp.bf16.pop %v1657
        %v1670 = vmul.bf16 1065369472, %v1669
        %v1671 = vrcp.bf16.pop %v1658
        %v1672 = vmul.bf16 1065369472, %v1671
        %v1673 = vrcp.bf16.pop %v1659
        %v1674 = vmul.bf16 1065369472, %v1673
        %v1675 = vrcp.bf16.pop %v1660
        %v1676 = vmul.bf16 1065369472, %v1675
        %v1677 = vrcp.bf16.pop %v1661
        %v1678 = vmul.bf16 1065369472, %v1677
        %v1679 = vrcp.bf16.pop %v1662
        %v1680 = vmul.bf16 1065369472, %v1679
        %v1681 = vrcp.bf16.pop %v1663
        %v1682 = vmul.bf16 1065369472, %v1681
        %v1683 = vrcp.bf16.pop %v1664
        %v1684 = vmul.bf16 1065369472, %v1683
        %v1685 = vrcp.bf16.pop %v1665
        %v1686 = vmul.bf16 1065369472, %v1685
        %v1687 = vrcp.bf16.pop %v1666
        %v1688 = vmul.bf16 1065369472, %v1687
        %v1689 = vrcp.bf16.pop %v1667
        %v1690 = vmul.bf16 1065369472, %v1689
        %v1691 = vrcp.bf16.pop %v1668
        %v1692 = vmul.bf16 1065369472, %v1691
        %v1693 = vmul.bf16 %v1597, %v1670
        %v1694 = vmul.bf16 %v1598, %v1672
        %v1695 = vmul.bf16 %v1599, %v1674
        %v1696 = vmul.bf16 %v1600, %v1676
        %v1697 = vmul.bf16 %v1601, %v1678
        %v1698 = vmul.bf16 %v1602, %v1680
        %v1699 = vmul.bf16 %v1603, %v1682
        %v1700 = vmul.bf16 %v1604, %v1684
        %v1701 = vmul.bf16 %v1605, %v1686
        %v1702 = vmul.bf16 %v1606, %v1688
        %v1703 = vmul.bf16 %v1607, %v1690
        %v1704 = vmul.bf16 %v1608, %v1692
        %v1705 = vunpack.c.l.bf16 %v1693
        %v1706 = vunpack.c.h.bf16 %v1693
        %v1707 = vunpack.c.l.bf16 %v1694
        %v1708 = vunpack.c.h.bf16 %v1694
        %v1709 = vunpack.c.l.bf16 %v1695
        %v1710 = vunpack.c.h.bf16 %v1695
        %v1711 = vunpack.c.l.bf16 %v1696
        %v1712 = vunpack.c.h.bf16 %v1696
        %v1713 = vunpack.c.l.bf16 %v1697
        %v1714 = vunpack.c.h.bf16 %v1697
        %v1715 = vunpack.c.l.bf16 %v1698
        %v1716 = vunpack.c.h.bf16 %v1698
        %v1717 = vunpack.c.l.bf16 %v1699
        %v1718 = vunpack.c.h.bf16 %v1699
        %v1719 = vunpack.c.l.bf16 %v1700
        %v1720 = vunpack.c.h.bf16 %v1700
        %v1721 = vunpack.c.l.bf16 %v1701
        %v1722 = vunpack.c.h.bf16 %v1701
        %v1723 = vunpack.c.l.bf16 %v1702
        %v1724 = vunpack.c.h.bf16 %v1702
        %v1725 = vunpack.c.l.bf16 %v1703
        %v1726 = vunpack.c.h.bf16 %v1703
        %v1727 = vunpack.c.l.bf16 %v1704
        %v1728 = vunpack.c.h.bf16 %v1704
        %v1729 = vadd.f32 %v1705, %v885
        %v1730 = vadd.f32 %v1706, %v888
        %v1731 = vadd.f32 %v1707, %v893
        %v1732 = vadd.f32 %v1708, %v896
        %v1733 = vadd.f32 %v1709, %v901
        %v1734 = vadd.f32 %v1710, %v904
        %v1735 = vadd.f32 %v1711, %v909
        %v1736 = vadd.f32 %v1712, %v912
        %v1737 = vadd.f32 %v1713, %v917
        %v1738 = vadd.f32 %v1714, %v920
        %v1739 = vadd.f32 %v1715, %v925
        %v1740 = vadd.f32 %v1716, %v928
        %v1741 = vadd.f32 %v1717, %v933
        %v1742 = vadd.f32 %v1718, %v936
        %v1743 = vadd.f32 %v1719, %v941
        %v1744 = vadd.f32 %v1720, %v944
        %v1745 = vadd.f32 %v1721, %v949
        %v1746 = vadd.f32 %v1722, %v952
        %v1747 = vadd.f32 %v1723, %v957
        %v1748 = vadd.f32 %v1724, %v960
        %v1749 = vadd.f32 %v1725, %v965
        %v1750 = vadd.f32 %v1726, %v968
        %v1751 = vadd.f32 %v1727, %v973
        %v1752 = vadd.f32 %v1728, %v976
        %v1753 = vpack.c.bf16 %v1730, %v1729
        %v1754 = vpack.c.bf16 %v1732, %v1731
        %v1755 = vpack.c.bf16 %v1734, %v1733
        %v1756 = vpack.c.bf16 %v1736, %v1735
        %v1757 = vpack.c.bf16 %v1738, %v1737
        %v1758 = vpack.c.bf16 %v1740, %v1739
        %v1759 = vpack.c.bf16 %v1742, %v1741
        %v1760 = vpack.c.bf16 %v1744, %v1743
        %v1761 = vpack.c.bf16 %v1746, %v1745
        %v1762 = vpack.c.bf16 %v1748, %v1747
        %v1763 = vpack.c.bf16 %v1750, %v1749
        %v1764 = vpack.c.bf16 %v1752, %v1751
        %v1765 = vxor.u32 %v1753, 2147516416
        %v1766 = vxor.u32 %v1754, 2147516416
        %v1767 = vxor.u32 %v1755, 2147516416
        %v1768 = vxor.u32 %v1756, 2147516416
        %v1769 = vxor.u32 %v1757, 2147516416
        %v1770 = vxor.u32 %v1758, 2147516416
        %v1771 = vxor.u32 %v1759, 2147516416
        %v1772 = vxor.u32 %v1760, 2147516416
        %v1773 = vxor.u32 %v1761, 2147516416
        %v1774 = vxor.u32 %v1762, 2147516416
        %v1775 = vxor.u32 %v1763, 2147516416
        %v1776 = vxor.u32 %v1764, 2147516416
        %v1778 = vmul.bf16 %v1765, 1069105081
        %v1779 = vpow.bf16.pop %v1778
        %v1781 = vmul.bf16 %v1766, 1069105081
        %v1782 = vpow.bf16.pop %v1781
        %v1784 = vmul.bf16 %v1767, 1069105081
        %v1785 = vpow.bf16.pop %v1784
        %v1787 = vmul.bf16 %v1768, 1069105081
        %v1788 = vpow.bf16.pop %v1787
        %v1790 = vmul.bf16 %v1769, 1069105081
        %v1791 = vpow.bf16.pop %v1790
        %v1793 = vmul.bf16 %v1770, 1069105081
        %v1794 = vpow.bf16.pop %v1793
        %v1796 = vmul.bf16 %v1771, 1069105081
        %v1797 = vpow.bf16.pop %v1796
        %v1799 = vmul.bf16 %v1772, 1069105081
        %v1800 = vpow.bf16.pop %v1799
        %v1802 = vmul.bf16 %v1773, 1069105081
        %v1803 = vpow.bf16.pop %v1802
        %v1805 = vmul.bf16 %v1774, 1069105081
        %v1806 = vpow.bf16.pop %v1805
        %v1808 = vmul.bf16 %v1775, 1069105081
        %v1809 = vpow.bf16.pop %v1808
        %v1811 = vmul.bf16 %v1776, 1069105081
        %v1812 = vpow.bf16.pop %v1811
        %v1813 = vadd.bf16 %v1779, 1065369472
        %v1814 = vadd.bf16 %v1782, 1065369472
        %v1815 = vadd.bf16 %v1785, 1065369472
        %v1816 = vadd.bf16 %v1788, 1065369472
        %v1817 = vadd.bf16 %v1791, 1065369472
        %v1818 = vadd.bf16 %v1794, 1065369472
        %v1819 = vadd.bf16 %v1797, 1065369472
        %v1820 = vadd.bf16 %v1800, 1065369472
        %v1821 = vadd.bf16 %v1803, 1065369472
        %v1822 = vadd.bf16 %v1806, 1065369472
        %v1823 = vadd.bf16 %v1809, 1065369472
        %v1824 = vadd.bf16 %v1812, 1065369472
        %v1825 = vrcp.bf16.pop %v1813
        %v1826 = vmul.bf16 1065369472, %v1825
        %v1827 = vrcp.bf16.pop %v1814
        %v1828 = vmul.bf16 1065369472, %v1827
        %v1829 = vrcp.bf16.pop %v1815
        %v1830 = vmul.bf16 1065369472, %v1829
        %v1831 = vrcp.bf16.pop %v1816
        %v1832 = vmul.bf16 1065369472, %v1831
        %v1833 = vrcp.bf16.pop %v1817
        %v1834 = vmul.bf16 1065369472, %v1833
        %v1835 = vrcp.bf16.pop %v1818
        %v1836 = vmul.bf16 1065369472, %v1835
        %v1837 = vrcp.bf16.pop %v1819
        %v1838 = vmul.bf16 1065369472, %v1837
        %v1839 = vrcp.bf16.pop %v1820
        %v1840 = vmul.bf16 1065369472, %v1839
        %v1841 = vrcp.bf16.pop %v1821
        %v1842 = vmul.bf16 1065369472, %v1841
        %v1843 = vrcp.bf16.pop %v1822
        %v1844 = vmul.bf16 1065369472, %v1843
        %v1845 = vrcp.bf16.pop %v1823
        %v1846 = vmul.bf16 1065369472, %v1845
        %v1847 = vrcp.bf16.pop %v1824
        %v1848 = vmul.bf16 1065369472, %v1847
        %v1849 = vmul.bf16 %v1753, %v1826
        %v1850 = vmul.bf16 %v1754, %v1828
        %v1851 = vmul.bf16 %v1755, %v1830
        %v1852 = vmul.bf16 %v1756, %v1832
        %v1853 = vmul.bf16 %v1757, %v1834
        %v1854 = vmul.bf16 %v1758, %v1836
        %v1855 = vmul.bf16 %v1759, %v1838
        %v1856 = vmul.bf16 %v1760, %v1840
        %v1857 = vmul.bf16 %v1761, %v1842
        %v1858 = vmul.bf16 %v1762, %v1844
        %v1859 = vmul.bf16 %v1763, %v1846
        %v1860 = vmul.bf16 %v1764, %v1848
        %v1861 = vld [vmem:[%s10] sm:$0xf]
        %v1862 = vld [vmem:[%s10 + $0x4] sm:$0xf]
        %v1863 = vld [vmem:[%s10 + $0x8] sm:$0xf]
        %v1864 = vld [vmem:[%s10 + $0xc] sm:$0xf]
        %v1865 = vld [vmem:[%s10 + $0x10] sm:$0xf]
        %v1866 = vld [vmem:[%s10 + $0x14] sm:$0xf]
        %v1867 = vld [vmem:[%s10 + $0x18] sm:$0xf]
        %v1868 = vld [vmem:[%s10 + $0x1c] sm:$0xf]
        %v1869 = vld [vmem:[%s10 + $0x20] sm:$0xf]
        %v1870 = vld [vmem:[%s10 + $0x24] sm:$0xf]
        %v1871 = vld [vmem:[%s10 + $0x28] sm:$0xf]
        %v1872 = vld [vmem:[%s10 + $0x2c] sm:$0xf]
        %v1873 = vld [vmem:[%s10 + $0x30] sm:$0xf]
        %v1874 = vld [vmem:[%s10 + $0x34] sm:$0xf]
        %v1875 = vld [vmem:[%s10 + $0x38] sm:$0xf]
        %v1876 = vld [vmem:[%s10 + $0x3c] sm:$0xf]
        %v1877 = vld [vmem:[#allocation16] sm:$0x1]
        %v1879 = vlaneseq
        %v1880 = vshrl.u32 %v1879, 7
        %v1881 = vsub.s32 0, %v1880
        %v1882 = vrot.slane %v1877, %v1881
        %v1900 = vunpack.c.l.b16 %v1861
        %v1901 = vunpack.c.l.b16 %v1862
        %v1902 = vunpack.c.l.b16 %v1863
        %v1903 = vunpack.c.l.b16 %v1864
        %v1904 = vunpack.c.l.b16 %v1865
        %v1905 = vunpack.c.l.b16 %v1866
        %v1906 = vunpack.c.l.b16 %v1867
        %v1907 = vunpack.c.l.b16 %v1868
        %v1908 = vunpack.c.l.b16 %v1869
        %v1909 = vunpack.c.l.b16 %v1870
        %v1910 = vunpack.c.l.b16 %v1871
        %v1911 = vunpack.c.l.b16 %v1872
        %v1912 = vunpack.c.l.b16 %v1873
        %v1913 = vunpack.c.l.b16 %v1874
        %v1914 = vunpack.c.l.b16 %v1875
        %v1915 = vunpack.c.l.b16 %v1876
        %v1916 = vpack.c.b16 %v1901, %v1900
        %v1917 = vpack.c.b16 %v1903, %v1902
        %v1918 = vpack.c.b16 %v1905, %v1904
        %v1919 = vpack.c.b16 %v1907, %v1906
        %v1920 = vpack.c.b16 %v1909, %v1908
        %v1921 = vpack.c.b16 %v1911, %v1910
        %v1922 = vpack.c.b16 %v1913, %v1912
        %v1923 = vpack.c.b16 %v1915, %v1914
        %1932 = vmatprep.subr.bf16.mxu0 0
        %1933 = vmatpush1.bf16.msra.mxu0 %v1923
        %1934 = vmatprep.subr.bf16.mxu0 0
        %1935 = vmatpush1.bf16.msra.mxu0 %v1922
        %1936 = vmatprep.subr.bf16.mxu0 0
        %1937 = vmatpush1.bf16.msra.mxu0 %v1921
        %1938 = vmatprep.subr.bf16.mxu0 0
        %1939 = vmatpush1.bf16.msra.mxu0 %v1920
        %1940 = vmatprep.subr.bf16.mxu0 0
        %1941 = vmatpush1.bf16.msra.mxu0 %v1919
        %1942 = vmatprep.subr.bf16.mxu0 0
        %1943 = vmatpush1.bf16.msra.mxu0 %v1918
        %1944 = vmatprep.subr.bf16.mxu0 0
        %1945 = vmatpush1.bf16.msra.mxu0 %v1917
        %1946 = vmatprep.subr.bf16.mxu0 0
        %1947 = vmatpush1.bf16.msra.mxu0 %v1916
        %1948 = vmatprep.subr.bf16.mxu0 0
        %1949 = vmatpush2.bf16.msra.mxu0 0
        %1950 = vmatprep.subr.bf16.mxu0 0
        %1951 = vmatpush2.bf16.msra.mxu0 0
        %1952 = vmatprep.subr.bf16.mxu0 0
        %1953 = vmatpush2.bf16.msra.mxu0 0
        %1954 = vmatprep.subr.bf16.mxu0 0
        %1955 = vmatpush2.bf16.msra.mxu0 0
        %1956 = vmatprep.subr.bf16.mxu0 0
        %1957 = vmatpush2.bf16.msra.mxu0 0
        %1958 = vmatprep.subr.bf16.mxu0 0
        %1959 = vmatpush2.bf16.msra.mxu0 0
        %1960 = vmatprep.subr.bf16.mxu0 0
        %1961 = vmatpush2.bf16.msra.mxu0 0
        %1962 = vmatprep.subr.bf16.mxu0 0
        %1963 = vmatpush2.bf16.msra.mxu0 0
        %1964 = vmatprep.mubr.bf16.mxu0 0
        %1965 = vmatmul.mubr.bf16.gmra.mxu0 %v1849
        %v1966 = vpop.f32.mrf.mxu0
        %v1967 = vadd.f32 %v1882, %v1966
        %v1968 = vpop.f32.mrf.mxu0
        %v1969 = vpop.f32.mrf.mxu0
        %v1970 = vadd.f32 %v1882, %v1969
        %v1971 = vpop.f32.mrf.mxu0
        %1972 = vmatprep.mubr.bf16.mxu0 0
        %1973 = vmatmul.mubr.bf16.gmra.mxu0 %v1850
        %v1974 = vpop.f32.mrf.mxu0
        %v1975 = vadd.f32 %v1882, %v1974
        %v1976 = vpop.f32.mrf.mxu0
        %v1977 = vpop.f32.mrf.mxu0
        %v1978 = vadd.f32 %v1882, %v1977
        %v1979 = vpop.f32.mrf.mxu0
        %1980 = vmatprep.mubr.bf16.mxu0 0
        %1981 = vmatmul.mubr.bf16.gmra.mxu0 %v1851
        %v1982 = vpop.f32.mrf.mxu0
        %v1983 = vadd.f32 %v1882, %v1982
        %v1984 = vpop.f32.mrf.mxu0
        %v1985 = vpop.f32.mrf.mxu0
        %v1986 = vadd.f32 %v1882, %v1985
        %v1987 = vpop.f32.mrf.mxu0
        %1988 = vmatprep.mubr.bf16.mxu0 0
        %1989 = vmatmul.mubr.bf16.gmra.mxu0 %v1852
        %v1990 = vpop.f32.mrf.mxu0
        %v1991 = vadd.f32 %v1882, %v1990
        %v1992 = vpop.f32.mrf.mxu0
        %v1993 = vpop.f32.mrf.mxu0
        %v1994 = vadd.f32 %v1882, %v1993
        %v1995 = vpop.f32.mrf.mxu0
        %1996 = vmatprep.mubr.bf16.mxu0 0
        %1997 = vmatmul.mubr.bf16.gmra.mxu0 %v1853
        %v1998 = vpop.f32.mrf.mxu0
        %v1999 = vadd.f32 %v1882, %v1998
        %v2000 = vpop.f32.mrf.mxu0
        %v2001 = vpop.f32.mrf.mxu0
        %v2002 = vadd.f32 %v1882, %v2001
        %v2003 = vpop.f32.mrf.mxu0
        %2004 = vmatprep.mubr.bf16.mxu0 0
        %2005 = vmatmul.mubr.bf16.gmra.mxu0 %v1854
        %v2006 = vpop.f32.mrf.mxu0
        %v2007 = vadd.f32 %v1882, %v2006
        %v2008 = vpop.f32.mrf.mxu0
        %v2009 = vpop.f32.mrf.mxu0
        %v2010 = vadd.f32 %v1882, %v2009
        %v2011 = vpop.f32.mrf.mxu0
        %2012 = vmatprep.mubr.bf16.mxu0 0
        %2013 = vmatmul.mubr.bf16.gmra.mxu0 %v1855
        %v2014 = vpop.f32.mrf.mxu0
        %v2015 = vadd.f32 %v1882, %v2014
        %v2016 = vpop.f32.mrf.mxu0
        %v2017 = vpop.f32.mrf.mxu0
        %v2018 = vadd.f32 %v1882, %v2017
        %v2019 = vpop.f32.mrf.mxu0
        %2020 = vmatprep.mubr.bf16.mxu0 0
        %2021 = vmatmul.mubr.bf16.gmra.mxu0 %v1856
        %v2022 = vpop.f32.mrf.mxu0
        %v2023 = vadd.f32 %v1882, %v2022
        %v2024 = vpop.f32.mrf.mxu0
        %v2025 = vpop.f32.mrf.mxu0
        %v2026 = vadd.f32 %v1882, %v2025
        %v2027 = vpop.f32.mrf.mxu0
        %2028 = vmatprep.mubr.bf16.mxu0 0
        %2029 = vmatmul.mubr.bf16.gmra.mxu0 %v1857
        %v2030 = vpop.f32.mrf.mxu0
        %v2031 = vadd.f32 %v1882, %v2030
        %v2032 = vpop.f32.mrf.mxu0
        %v2033 = vpop.f32.mrf.mxu0
        %v2034 = vadd.f32 %v1882, %v2033
        %v2035 = vpop.f32.mrf.mxu0
        %2036 = vmatprep.mubr.bf16.mxu0 0
        %2037 = vmatmul.mubr.bf16.gmra.mxu0 %v1858
        %v2038 = vpop.f32.mrf.mxu0
        %v2039 = vadd.f32 %v1882, %v2038
        %v2040 = vpop.f32.mrf.mxu0
        %v2041 = vpop.f32.mrf.mxu0
        %v2042 = vadd.f32 %v1882, %v2041
        %v2043 = vpop.f32.mrf.mxu0
        %2044 = vmatprep.mubr.bf16.mxu0 0
        %2045 = vmatmul.mubr.bf16.gmra.mxu0 %v1859
        %v2046 = vpop.f32.mrf.mxu0
        %v2047 = vadd.f32 %v1882, %v2046
        %v2048 = vpop.f32.mrf.mxu0
        %v2049 = vpop.f32.mrf.mxu0
        %v2050 = vadd.f32 %v1882, %v2049
        %v2051 = vpop.f32.mrf.mxu0
        %2052 = vmatprep.mubr.bf16.mxu0 0
        %2053 = vmatmul.mubr.bf16.gmra.mxu0 %v1860
        %v2054 = vpop.f32.mrf.mxu0
        %v2055 = vadd.f32 %v1882, %v2054
        %v2056 = vpop.f32.mrf.mxu0
        %v2057 = vpop.f32.mrf.mxu0
        %v2058 = vadd.f32 %v1882, %v2057
        %v2059 = vpop.f32.mrf.mxu0
        %2060 = vdwg.mxu0
        %v2061 = vadd.f32 %v558, %v1967
        %v2062 = vadd.f32 %v559, %v1970
        %v2063 = vadd.f32 %v560, %v1975
        %v2064 = vadd.f32 %v561, %v1978
        %v2065 = vadd.f32 %v562, %v1983
        %v2066 = vadd.f32 %v563, %v1986
        %v2067 = vadd.f32 %v564, %v1991
        %v2068 = vadd.f32 %v565, %v1994
        %v2069 = vadd.f32 %v566, %v1999
        %v2070 = vadd.f32 %v567, %v2002
        %v2071 = vadd.f32 %v568, %v2007
        %v2072 = vadd.f32 %v569, %v2010
        %v2073 = vadd.f32 %v570, %v2015
        %v2074 = vadd.f32 %v571, %v2018
        %v2075 = vadd.f32 %v572, %v2023
        %v2076 = vadd.f32 %v573, %v2026
        %v2077 = vadd.f32 %v574, %v2031
        %v2078 = vadd.f32 %v575, %v2034
        %v2079 = vadd.f32 %v576, %v2039
        %v2080 = vadd.f32 %v577, %v2042
        %v2081 = vadd.f32 %v578, %v2047
        %v2082 = vadd.f32 %v579, %v2050
        %v2083 = vadd.f32 %v580, %v2055
        %v2084 = vadd.f32 %v581, %v2058
        %2085 = vst [vmem:[%s542] sm:$0xff] %v2061
        %2086 = vst [vmem:[%s542 + $0x8] sm:$0xff] %v2062
        %2087 = vst [vmem:[%s542 + $0x10] sm:$0xff] %v2063
        %2088 = vst [vmem:[%s542 + $0x18] sm:$0xff] %v2064
        %2089 = vst [vmem:[%s542 + $0x20] sm:$0xff] %v2065
        %2090 = vst [vmem:[%s542 + $0x28] sm:$0xff] %v2066
        %2091 = vst [vmem:[%s542 + $0x30] sm:$0xff] %v2067
        %2092 = vst [vmem:[%s542 + $0x38] sm:$0xff] %v2068
        %2093 = vst [vmem:[%s542 + $0x40] sm:$0xff] %v2069
        %2094 = vst [vmem:[%s542 + $0x48] sm:$0xff] %v2070
        %2095 = vst [vmem:[%s542 + $0x50] sm:$0xff] %v2071
        %2096 = vst [vmem:[%s542 + $0x58] sm:$0xff] %v2072
        %2097 = vst [vmem:[%s542 + $0x60] sm:$0xff] %v2073
        %2098 = vst [vmem:[%s542 + $0x68] sm:$0xff] %v2074
        %2099 = vst [vmem:[%s542 + $0x70] sm:$0xff] %v2075
        %2100 = vst [vmem:[%s542 + $0x78] sm:$0xff] %v2076
        %2101 = vst [vmem:[%s542 + $0x80] sm:$0xff] %v2077
        %2102 = vst [vmem:[%s542 + $0x88] sm:$0xff] %v2078
        %2103 = vst [vmem:[%s542 + $0x90] sm:$0xff] %v2079
        %2104 = vst [vmem:[%s542 + $0x98] sm:$0xff] %v2080
        %2105 = vst [vmem:[%s542 + $0xa0] sm:$0xff] %v2081
        %2106 = vst [vmem:[%s542 + $0xa8] sm:$0xff] %v2082
        %2107 = vst [vmem:[%s542 + $0xb0] sm:$0xff] %v2083
        %2108 = vst [vmem:[%s542 + $0xb8] sm:$0xff] %v2084
        %s2109 = sand.u32 %s301, 1
        %s2110 = scalar_lea.sflag [#allocation4], %s2109
        %s2111 = sand.u32 %s301, 1
        %s2112 = smul.addr %s2111, 192
        %s2113 = scalar_lea.vmem [#allocation17], %s2112
        // Predicated region
        $region105: #{tpu_custom_call.1} parent=67 // pred_check
          %p2114 = pneg %p311
        $region106: #{tpu_custom_call.1} parent=67 // pred_check_branch
          %2116 = sbr.rel (%p2114) target = $region108
        $region107: #{tpu_custom_call.1} parent=67 // pred_region
          %s2117 = smul.u32 24, %s31
          %s2119 = ssub.s32 3072, 3072
          %2120 = vsyncadd %s2110, %s2119
          %s2121 = smul.addr %s2117, 128
          %s2122 = scalar_lea.hbm %s12, %s2121
          %s2123 = sshll.u32 %s2113, 4
          %s2124 = int_to_ptr.vmem [resolvable:$true] %s2123
          %2129 = dma.vmem_to_hbm [thread:$0]  %s2124, 3072, %s2122, %s2110, 128, 128, 8
        $region108: #{tpu_custom_call.1} parent=67 // pred_fallthru
          _
      $region68: #{tpu_custom_call.1} parent=5 // pred_fallthru
        _
      %p2130 = scmp.le.s32.totalorder 2, %s26
      // Predicated region
      $region109: #{tpu_custom_call.1} parent=5 // pred_check
        %p2131 = pneg %p2130
      $region110: #{tpu_custom_call.1} parent=5 // pred_check_branch
        %2133 = sbr.rel (%p2131) target = $region112
      $region111: #{tpu_custom_call.1} parent=5 // pred_region
        %s2134 = ssub.s32 %s26, 2
        // Predicated region
        $region113: #{tpu_custom_call.1} parent=111 // pred_check
          %p2135 = pneg %p317
        $region114: #{tpu_custom_call.1} parent=111 // pred_check_branch
          %2137 = sbr.rel (%p2135) target = $region116
        $region115: #{tpu_custom_call.1} parent=111 // pred_region
          %s2138 = sand.u32 %s302, 1
          %s2139 = scalar_lea.sflag [#allocation4], %s2138
          %s2140 = sand.u32 %s302, 1
          %s2141 = smul.addr %s2140, 192
          %s2142 = scalar_lea.vmem [#allocation17], %s2141
          %2143 = dma.done %s2139, 3072
        $region116: #{tpu_custom_call.1} parent=111 // pred_fallthru
          _
      $region112: #{tpu_custom_call.1} parent=5 // pred_fallthru
        _
    $region6: #{tpu_custom_call.1} parent=1 // loop_footer
      %s30 = sadd.s32 1, %s26
    $region7: #{tpu_custom_call.1} parent=1 // loop_footer_branch
      %25 = sbr.rel target = $region3
    $region8: #{tpu_custom_call.1} parent=1 // loop_exit
      _
    %2144 = vsyncpa [#allocation3], 1
    %s2145 = scalar_lea.sflag [#allocation3], 1
    %2146 = vsyncpa %s2145, 1
    %2147 = vsyncpa [#allocation6], 1
    %2148 = vsyncpa [#allocation9], 1
    %2149 = vsyncpa [#allocation12], 1
    %2150 = vsyncpa [#allocation15], 1
    %2151 = vsyncpa [#allocation4], 1
    %s2152 = scalar_lea.sflag [#allocation4], 1
    %2153 = vsyncpa %s2152, 1

</llo_original>
